<compile_context>
chip_gen: v6e
topology: v6e:2x2x1
jax: 0.10.0
libtpu: 0.0.40
codegen_flags: <defaults>
</compile_context>

<pallas_src>
import jax
import jax.numpy as jnp
from jax.experimental import pallas as pl
from jax.experimental.pallas import tpu as pltpu


def _fourier_kernel(x_ref, bq_ref, phase_ref, o_ref):
    # x_ref:     (tm_p, p*D)    packed input rows
    # bq_ref:    (p*D,  p*2F)   kron(I_p, [B | B])   (VMEM-resident)
    # phase_ref: (1,    p*2F)   0 for sin cols, pi/2 for cos cols (resident)
    # o_ref:     (tm_p, p*2F)   packed output rows (lane-dense, >= 128 wide)
    zp = jnp.dot(x_ref[...], bq_ref[...], preferred_element_type=jnp.float32)
    zp = zp + phase_ref[...]                        # (1, W) broadcast over rows
    o_ref[...] = jnp.sin(zp).astype(o_ref.dtype)    # single full-width store


def fourier_feature_layer(inputs, B, *, block_rows=2048, out_dtype=None):
    """Pallas TPU FourierFeatureLayer.forward.

    inputs: [..., D], B: [D, F]  ->  [..., 2F] = concat(sin(x@B), cos(x@B)).
    block_rows: row-tile size (sweep 1024-4096; go higher on v7x).
    out_dtype: optionally bf16 to halve output HBM bytes (compute stays f32).
    """
    *lead, D = inputs.shape
    D_b, F = B.shape
    assert D == D_b, "inputs[..., D] and B[D, F] must agree"
    out_dtype = out_dtype if out_dtype is not None else inputs.dtype
    two_f = 2 * F

    x = inputs.reshape(-1, D)
    N = x.shape[0]

    # Row-packing factor so the stored block's last dim is a multiple of 128.
    if two_f % 128 == 0:
        p = 1
    elif 128 % two_f == 0:
        p = 128 // two_f
    else:
        p = 1  # odd widths: still correct, stores fall back to masked vst
    W = p * two_f

    # Packed projection matrix + phase: out_row = sin(x_packed @ Bq + phase).
    b32 = B.astype(jnp.float32)
    b_cat = jnp.concatenate([b32, b32], axis=1)                   # (D, 2F)
    bq = jnp.kron(jnp.eye(p, dtype=jnp.float32), b_cat)           # (p*D, p*2F)
    phase_1f = jnp.concatenate(
        [jnp.zeros((F,), jnp.float32), jnp.full((F,), jnp.pi / 2, jnp.float32)])
    phase = jnp.tile(phase_1f, p).reshape(1, W)                   # (1, p*2F)

    # Tile size in packed rows; pad N so the grid divides evenly (padded rows
    # are harmless and sliced off below).
    n_p = -(-N // p)                                   # packed rows needed
    tm_p = max(8, block_rows // p)
    tm_p = min(tm_p, -(-n_p // 8) * 8)                 # don't exceed the data
    tm_p = -(-tm_p // 8) * 8                           # multiple of 8 sublanes
    n_p_pad = -(-n_p // tm_p) * tm_p
    n_pad = n_p_pad * p
    if n_pad != N:
        x = jnp.pad(x, ((0, n_pad - N), (0, 0)))
    x_packed = x.reshape(n_p_pad, p * D)               # free row-major reshape

    grid = (n_p_pad // tm_p,)

    out_packed = pl.pallas_call(
        _fourier_kernel,
        out_shape=jax.ShapeDtypeStruct((n_p_pad, W), out_dtype),
        grid_spec=pltpu.PrefetchScalarGridSpec(
            num_scalar_prefetch=0,
            grid=grid,
            in_specs=[
                pl.BlockSpec((tm_p, p * D), lambda i: (i, 0)),  # streamed rows
                pl.BlockSpec((p * D, W), lambda i: (0, 0)),     # Bq: resident
                pl.BlockSpec((1, W), lambda i: (0, 0)),         # phase: resident
            ],
            out_specs=pl.BlockSpec((tm_p, W), lambda i: (i, 0)),
        ),
        compiler_params=pltpu.CompilerParams(
            dimension_semantics=("parallel",),  # shard grid across TCs on v7x
        ),
    )(x_packed, bq, phase)

    # Free reinterpretation back to [N, 2F], drop padding, restore lead dims.
    out = out_packed.reshape(n_pad, two_f)[:N]
    return out.reshape(*lead, two_f)


def init_B(key, input_dim, fourier_dim=32, scale=10.0, temporal_scale=None):
    """Deterministic replication of FourierFeatureLayer._initialize_B."""
    if temporal_scale is not None and input_dim >= 3:
        B = jax.random.normal(key, (input_dim, fourier_dim), dtype=jnp.float32)
        scales_vec = jnp.ones((input_dim,), dtype=jnp.float32)
        scales_vec = scales_vec.at[input_dim - 1].set(temporal_scale / scale)
        B = (scales_vec[:, None] * B) * scale
    else:
        B = scale * jax.random.normal(key, (input_dim, fourier_dim), dtype=jnp.float32)
    return B


if __name__ == "__main__":
    key = jax.random.PRNGKey(0)
    kx, kb = jax.random.split(key)

    N, D = 256, 3          # e.g. (x, y, t) coordinates
    fourier_dim = 32
    scale = 10.0

    x = jax.random.normal(kx, (N, D), dtype=jnp.float32)
    B = init_B(kb, D, fourier_dim=fourier_dim, scale=scale, temporal_scale=None)

    out = jax.jit(fourier_feature_layer)(x, B)
    out = jax.block_until_ready(out)

    # Reference check in plain JAX.
    x_proj = x @ B
    ref = jnp.concatenate([jnp.sin(x_proj), jnp.cos(x_proj)], axis=-1)
    assert out.shape == (N, 2 * fourier_dim)
    # cos is evaluated as sin(x + pi/2); allow ~eps*|x_proj| absolute slack.
    assert jnp.allclose(out, ref, atol=3e-5, rtol=1e-5), float(
        jnp.max(jnp.abs(out - ref)))

    print("KERNEL_OK")
</pallas_src>

<mosaic_0001>
module attributes {stable_mosaic.version = 11 : i64} {
  func.func @_fourier_kernel(%arg0: i32, %arg1: memref<128x6xf32, #tpu.memory_space<vmem>>, %arg2: memref<6x128xf32, #tpu.memory_space<vmem>>, %arg3: memref<1x128xf32, #tpu.memory_space<vmem>>, %arg4: memref<128x128xf32, #tpu.memory_space<vmem>>) attributes {dimension_semantics = [#tpu.dimension_semantics<parallel>], iteration_bounds = array<i64: 1>, scalar_prefetch = 0 : i64, scratch_operands = 0 : i64, tpu.core_type = #tpu.core_type<tc>, window_params = [{transform_indices = @transform_0, window_bounds = array<i64: 128, 6>}, {pipeline_mode = #tpu.pipeline_mode<synchronous>, transform_indices = @transform_1, window_bounds = array<i64: 6, 128>}, {pipeline_mode = #tpu.pipeline_mode<synchronous>, transform_indices = @transform_2, window_bounds = array<i64: 1, 128>}, {transform_indices = @transform_3, window_bounds = array<i64: 128, 128>}]} {
    %c0 = arith.constant 0 : index
    %c0_0 = arith.constant 0 : index
    %0 = vector.load %arg1[%c0, %c0_0] : memref<128x6xf32, #tpu.memory_space<vmem>>, vector<128x6xf32>
    %c0_1 = arith.constant 0 : index
    %c0_2 = arith.constant 0 : index
    %1 = vector.load %arg2[%c0_1, %c0_2] : memref<6x128xf32, #tpu.memory_space<vmem>>, vector<6x128xf32>
    %cst = arith.constant dense<0.000000e+00> : vector<128x128xf32>
    %2 = tpu.matmul %0, %1, %cst {dimension_numbers = #tpu.dot_dimension_numbers<[1], [0], [0], [1], [0, 0, 1, 1], [], []>} : vector<128x6xf32>, vector<6x128xf32>, vector<128x128xf32> -> vector<128x128xf32>
    %c0_3 = arith.constant 0 : index
    %c0_4 = arith.constant 0 : index
    %3 = vector.load %arg3[%c0_3, %c0_4] : memref<1x128xf32, #tpu.memory_space<vmem>>, vector<1x128xf32>
    %4 = vector.broadcast %3 : vector<1x128xf32> to vector<128x128xf32>
    %5 = arith.addf %2, %4 : vector<128x128xf32>
    %6 = math.sin %5 : vector<128x128xf32>
    %c0_5 = arith.constant 0 : index
    %c0_6 = arith.constant 0 : index
    %7 = vector.load %arg4[%c0_5, %c0_6] : memref<128x128xf32, #tpu.memory_space<vmem>>, vector<128x128xf32>
    tpu.vector_store %arg4[%c0_5, %c0_6], %6 {strides = array<i32>} : memref<128x128xf32, #tpu.memory_space<vmem>>, vector<128x128xf32>,
    return
  }
  func.func @transform_0(%arg0: i32) -> (i32, i32) {
    %c0_i32 = arith.constant 0 : i32
    %c0_i32_0 = arith.constant 0 : i32
    return %arg0, %c0_i32 : i32, i32
  }
  func.func @transform_1(%arg0: i32) -> (i32, i32) {
    %c0_i32 = arith.constant 0 : i32
    %c0_i32_0 = arith.constant 0 : i32
    %c0_i32_1 = arith.constant 0 : i32
    return %c0_i32, %c0_i32_0 : i32, i32
  }
  func.func @transform_2(%arg0: i32) -> (i32, i32) {
    %c0_i32 = arith.constant 0 : i32
    %c0_i32_0 = arith.constant 0 : i32
    %c0_i32_1 = arith.constant 0 : i32
    return %c0_i32, %c0_i32_0 : i32, i32
  }
  func.func @transform_3(%arg0: i32) -> (i32, i32) {
    %c0_i32 = arith.constant 0 : i32
    %c0_i32_0 = arith.constant 0 : i32
    return %arg0, %c0_i32 : i32, i32
  }
}

</mosaic_0001>

<llo_original>
// kernel: tile.6
$region0: #{tile.6}
  #allocation0 [shape = 's32[1]{0}', space=sflag, size = 0x4, scoped, tag = 'scoped memory for tile.6']
  %s0 = inlined_call_operand.vmem [shape: f32[64], index: 0, kind: input, shape index: {}]
  %s1 = inlined_call_operand.vmem [shape: f32[2,64], index: 1, kind: output, shape index: {}]
  // Predicated region
  $region2: #{tile.6} parent=0 // pred_check
    _
  $region3: #{tile.6} parent=0 // pred_check_branch
    %3 = sbr.rel (0) target = $region5
  $region4: #{tile.6} parent=0 // pred_region
    _
  $region5: #{tile.6} parent=0 // pred_fallthru
    _
  %v4 = vld [vmem:[%s0] ss:$0 sm:$0xff]
  %5 = vst [vmem:[%s1] sm:$0x3] %v4

// kernel: tile.7
$region0: #{tile.7}
  %s0 = inlined_call_operand.vmem [shape: f32[2,64], index: 0, kind: input, shape index: {}]
  %s1 = inlined_call_operand.vmem [shape: f32[1,128], index: 1, kind: output, shape index: {}]
  $region1: #{tile.7} parent=0
    #allocation0 [shape = 'u8[4096]{0}', space=vmem, size = 0x1000, scoped, tag = 'scoped mem for output reshape']
    #allocation1 [shape = 'u8[4096]{0}', space=vmem, size = 0x1000, scoped, tag = 'scoped mem for input reshape']
    %s3 = sshll.u32 1, 2
    %s4 = ssub.s32 %s3, 1
    %v5 = vld [vmem:[%s0] sm:%s4]
    %6 = vst [vmem:[#allocation1] sm:%s4] %v5
    %v7 = vld [vmem:[#allocation1] sm:$0x1]
    %vm8 = vcmask 523264
    %9 = vst.msk [vmem:[#allocation0] sm:$0x1] %vm8, %v7
    %s10 = scalar_lea.vmem [#allocation1], 1
    %v11 = vld [vmem:[%s10] sm:$0x1]
    %12 = vrot.lane.b32.xlu0 %v11, 64
    %v13 = vpop.permute.xlu0 %12
    %vm14 = vcmask 1048064
    %15 = vst.msk [vmem:[#allocation0] sm:$0x1] %vm14, %v13
    %s17 = sshll.u32 1, 1
    %s18 = ssub.s32 %s17, 1
    %v20 = vld [vmem:[#allocation0] sm:%s18]
    %s21 = sshll.u32 1, 1
    %s22 = ssub.s32 %s21, 1
    %23 = vst [vmem:[%s1] sm:%s22] %v20

// kernel: fourier_feature_layer.1
$region0: #{fourier_feature_layer.1}
  #allocation0 [shape = 'u32[]', space=smem, size = 0x4, offset = 0x4, fixed_abs, tag = 'smem constant byte address 0x4 - core index']
  #allocation1 [shape = 'u32[144,128]{1,0:T(1,128)}', space=vmem, size = 0x12000, scoped, tag = 'internal scratch']
  %s0 = inlined_call_operand.vmem [shape: f32[128,6], index: 0, kind: input, shape index: {}]
  %s1 = inlined_call_operand.vmem [shape: f32[6,128], index: 1, kind: input, shape index: {}]
  %s2 = inlined_call_operand.vmem [shape: f32[1,128], index: 2, kind: input, shape index: {}]
  %s3 = inlined_call_operand.vmem [shape: f32[128,128], index: 3, kind: output, shape index: {}]
  %s4 = sld [smem:[#allocation0]]
  $region22: #{fourier_feature_layer.1} parent=0
    _
  %s6 = ssub.s32 1, %s4
  %s7 = scalar_select 0, %s6, %s4
  // Predicated region
  $region2: #{fourier_feature_layer.1} parent=0 // pred_check
    _
  $region3: #{fourier_feature_layer.1} parent=0 // pred_check_branch
    %9 = sbr.rel (0) target = $region5
  $region4: #{fourier_feature_layer.1} parent=0 // pred_region
    _
  $region5: #{fourier_feature_layer.1} parent=0 // pred_fallthru
    _
  // Predicated region
  $region6: #{fourier_feature_layer.1} parent=0 // pred_check
    _
  $region7: #{fourier_feature_layer.1} parent=0 // pred_check_branch
    %11 = sbr.rel (0) target = $region9
  $region8: #{fourier_feature_layer.1} parent=0 // pred_region
    _
  $region9: #{fourier_feature_layer.1} parent=0 // pred_fallthru
    _
  // Predicated region
  $region10: #{fourier_feature_layer.1} parent=0 // pred_check
    _
  $region11: #{fourier_feature_layer.1} parent=0 // pred_check_branch
    %13 = sbr.rel (0) target = $region13
  $region12: #{fourier_feature_layer.1} parent=0 // pred_region
    _
  $region13: #{fourier_feature_layer.1} parent=0 // pred_fallthru
    _
  %v14 = vld [vmem:[%s0] sm:$0xff]
  %v15 = vld [vmem:[%s0 + $0x8] sm:$0xff]
  %v16 = vld [vmem:[%s0 + $0x10] sm:$0xff]
  %v17 = vld [vmem:[%s0 + $0x18] sm:$0xff]
  %v18 = vld [vmem:[%s0 + $0x20] sm:$0xff]
  %v19 = vld [vmem:[%s0 + $0x28] sm:$0xff]
  %v20 = vld [vmem:[%s0 + $0x30] sm:$0xff]
  %v21 = vld [vmem:[%s0 + $0x38] sm:$0xff]
  %v22 = vld [vmem:[%s0 + $0x40] sm:$0xff]
  %v23 = vld [vmem:[%s0 + $0x48] sm:$0xff]
  %v24 = vld [vmem:[%s0 + $0x50] sm:$0xff]
  %v25 = vld [vmem:[%s0 + $0x58] sm:$0xff]
  %v26 = vld [vmem:[%s0 + $0x60] sm:$0xff]
  %v27 = vld [vmem:[%s0 + $0x68] sm:$0xff]
  %v28 = vld [vmem:[%s0 + $0x70] sm:$0xff]
  %v29 = vld [vmem:[%s0 + $0x78] sm:$0xff]
  %v30 = vld [vmem:[%s1] sm:$0x3f]
  %v31 = vld [vmem:[%s2] sm:$0x1]
  %v33 = vlaneseq
  %v34 = vshrl.u32 %v33, 7
  %v35 = vsub.s32 0, %v34
  %v36 = vrot.slane %v31, %v35
  %vm38 = vcmask 48128
  %v40 = vsel %vm38, %v14, 0
  %v43 = vsel %vm38, %v15, 0
  %v46 = vsel %vm38, %v16, 0
  %v49 = vsel %vm38, %v17, 0
  %v52 = vsel %vm38, %v18, 0
  %v55 = vsel %vm38, %v19, 0
  %v58 = vsel %vm38, %v20, 0
  %v61 = vsel %vm38, %v21, 0
  %v64 = vsel %vm38, %v22, 0
  %v67 = vsel %vm38, %v23, 0
  %v70 = vsel %vm38, %v24, 0
  %v73 = vsel %vm38, %v25, 0
  %v76 = vsel %vm38, %v26, 0
  %v79 = vsel %vm38, %v27, 0
  %v82 = vsel %vm38, %v28, 0
  %v85 = vsel %vm38, %v29, 0
  %vm87 = vcmask 1045504
  %v89 = vsel %vm87, %v30, 0
  %91 = vmatprep.subr.mxu0 0.0
  %92 = vmatpush1.msra.mxu0 0.0
  %93 = vmatprep.subr.mxu0 0.0
  %94 = vmatpush1.msra.mxu0 0.0
  %95 = vmatprep.subr.mxu0 0.0
  %96 = vmatpush1.msra.mxu0 0.0
  %97 = vmatprep.subr.mxu0 0.0
  %98 = vmatpush1.msra.mxu0 0.0
  %99 = vmatprep.subr.mxu0 0.0
  %100 = vmatpush1.msra.mxu0 0.0
  %101 = vmatprep.subr.mxu0 0.0
  %102 = vmatpush1.msra.mxu0 0.0
  %103 = vmatprep.subr.mxu0 0.0
  %104 = vmatpush1.msra.mxu0 0.0
  %105 = vmatprep.subr.mxu0 0.0
  %106 = vmatpush1.msra.mxu0 0.0
  %107 = vmatprep.subr.mxu0 0.0
  %108 = vmatpush1.msra.mxu0 0.0
  %109 = vmatprep.subr.mxu0 0.0
  %110 = vmatpush1.msra.mxu0 0.0
  %111 = vmatprep.subr.mxu0 0.0
  %112 = vmatpush1.msra.mxu0 0.0
  %113 = vmatprep.subr.mxu0 0.0
  %114 = vmatpush1.msra.mxu0 0.0
  %115 = vmatprep.subr.mxu0 0.0
  %116 = vmatpush1.msra.mxu0 0.0
  %117 = vmatprep.subr.mxu0 0.0
  %118 = vmatpush1.msra.mxu0 0.0
  %119 = vmatprep.subr.mxu0 0.0
  %120 = vmatpush1.msra.mxu0 0.0
  %121 = vmatprep.subr.mxu0 0.0
  %122 = vmatpush1.msra.mxu0 %v89
  %123 = vmatprep.subr.mxu0 0.0
  %124 = vmatpush2.msra.mxu0 0.0
  %125 = vmatprep.subr.mxu0 0.0
  %126 = vmatpush2.msra.mxu0 0.0
  %127 = vmatprep.subr.mxu0 0.0
  %128 = vmatpush2.msra.mxu0 0.0
  %129 = vmatprep.subr.mxu0 0.0
  %130 = vmatpush2.msra.mxu0 0.0
  %131 = vmatprep.subr.mxu0 0.0
  %132 = vmatpush2.msra.mxu0 0.0
  %133 = vmatprep.subr.mxu0 0.0
  %134 = vmatpush2.msra.mxu0 0.0
  %135 = vmatprep.subr.mxu0 0.0
  %136 = vmatpush2.msra.mxu0 0.0
  %137 = vmatprep.subr.mxu0 0.0
  %138 = vmatpush2.msra.mxu0 0.0
  %139 = vmatprep.subr.mxu0 0.0
  %140 = vmatpush2.msra.mxu0 0.0
  %141 = vmatprep.subr.mxu0 0.0
  %142 = vmatpush2.msra.mxu0 0.0
  %143 = vmatprep.subr.mxu0 0.0
  %144 = vmatpush2.msra.mxu0 0.0
  %145 = vmatprep.subr.mxu0 0.0
  %146 = vmatpush2.msra.mxu0 0.0
  %147 = vmatprep.subr.mxu0 0.0
  %148 = vmatpush2.msra.mxu0 0.0
  %149 = vmatprep.subr.mxu0 0.0
  %150 = vmatpush2.msra.mxu0 0.0
  %151 = vmatprep.subr.mxu0 0.0
  %152 = vmatpush2.msra.mxu0 0.0
  %153 = vmatprep.subr.mxu0 0.0
  %154 = vmatpush2.msra.mxu0 0.0
  %155 = vmatprep.mubr.f32.mxu0 0.0
  %156 = vmatmul.mubr.f32.gmra.mxu0 %v40
  %v157 = vpop.f32.mrf.mxu0
  %v158 = vadd.f32 %v36, %v157
  %v159 = vpop.f32.mrf.mxu0
  %160 = vmatprep.mubr.f32.mxu0 0.0
  %161 = vmatmul.mubr.f32.gmra.mxu0 %v43
  %v162 = vpop.f32.mrf.mxu0
  %v163 = vadd.f32 %v36, %v162
  %v164 = vpop.f32.mrf.mxu0
  %165 = vmatprep.mubr.f32.mxu0 0.0
  %166 = vmatmul.mubr.f32.gmra.mxu0 %v46
  %v167 = vpop.f32.mrf.mxu0
  %v168 = vadd.f32 %v36, %v167
  %v169 = vpop.f32.mrf.mxu0
  %170 = vmatprep.mubr.f32.mxu0 0.0
  %171 = vmatmul.mubr.f32.gmra.mxu0 %v49
  %v172 = vpop.f32.mrf.mxu0
  %v173 = vadd.f32 %v36, %v172
  %v174 = vpop.f32.mrf.mxu0
  %175 = vmatprep.mubr.f32.mxu0 0.0
  %176 = vmatmul.mubr.f32.gmra.mxu0 %v52
  %v177 = vpop.f32.mrf.mxu0
  %v178 = vadd.f32 %v36, %v177
  %v179 = vpop.f32.mrf.mxu0
  %180 = vmatprep.mubr.f32.mxu0 0.0
  %181 = vmatmul.mubr.f32.gmra.mxu0 %v55
  %v182 = vpop.f32.mrf.mxu0
  %v183 = vadd.f32 %v36, %v182
  %v184 = vpop.f32.mrf.mxu0
  %185 = vmatprep.mubr.f32.mxu0 0.0
  %186 = vmatmul.mubr.f32.gmra.mxu0 %v58
  %v187 = vpop.f32.mrf.mxu0
  %v188 = vadd.f32 %v36, %v187
  %v189 = vpop.f32.mrf.mxu0
  %190 = vmatprep.mubr.f32.mxu0 0.0
  %191 = vmatmul.mubr.f32.gmra.mxu0 %v61
  %v192 = vpop.f32.mrf.mxu0
  %v193 = vadd.f32 %v36, %v192
  %v194 = vpop.f32.mrf.mxu0
  %195 = vmatprep.mubr.f32.mxu0 0.0
  %196 = vmatmul.mubr.f32.gmra.mxu0 %v64
  %v197 = vpop.f32.mrf.mxu0
  %v198 = vadd.f32 %v36, %v197
  %v199 = vpop.f32.mrf.mxu0
  %200 = vmatprep.mubr.f32.mxu0 0.0
  %201 = vmatmul.mubr.f32.gmra.mxu0 %v67
  %v202 = vpop.f32.mrf.mxu0
  %v203 = vadd.f32 %v36, %v202
  %v204 = vpop.f32.mrf.mxu0
  %205 = vmatprep.mubr.f32.mxu0 0.0
  %206 = vmatmul.mubr.f32.gmra.mxu0 %v70
  %v207 = vpop.f32.mrf.mxu0
  %v208 = vadd.f32 %v36, %v207
  %v209 = vpop.f32.mrf.mxu0
  %210 = vmatprep.mubr.f32.mxu0 0.0
  %211 = vmatmul.mubr.f32.gmra.mxu0 %v73
  %v212 = vpop.f32.mrf.mxu0
  %v213 = vadd.f32 %v36, %v212
  %v214 = vpop.f32.mrf.mxu0
  %215 = vmatprep.mubr.f32.mxu0 0.0
  %216 = vmatmul.mubr.f32.gmra.mxu0 %v76
  %v217 = vpop.f32.mrf.mxu0
  %v218 = vadd.f32 %v36, %v217
  %v219 = vpop.f32.mrf.mxu0
  %220 = vmatprep.mubr.f32.mxu0 0.0
  %221 = vmatmul.mubr.f32.gmra.mxu0 %v79
  %v222 = vpop.f32.mrf.mxu0
  %v223 = vadd.f32 %v36, %v222
  %v224 = vpop.f32.mrf.mxu0
  %225 = vmatprep.mubr.f32.mxu0 0.0
  %226 = vmatmul.mubr.f32.gmra.mxu0 %v82
  %v227 = vpop.f32.mrf.mxu0
  %v228 = vadd.f32 %v36, %v227
  %v229 = vpop.f32.mrf.mxu0
  %230 = vmatprep.mubr.f32.mxu0 0.0
  %231 = vmatmul.mubr.f32.gmra.mxu0 %v85
  %v232 = vpop.f32.mrf.mxu0
  %v233 = vadd.f32 %v36, %v232
  %v234 = vpop.f32.mrf.mxu0
  %235 = vdwg.mxu0
  %v236 = vand.u32 2147483647, %v158
  %vm237 = vcmp.le.f32.partialorder %v236, 0.7853982
  %vm238 = vcmp.lt.s32.totalorder %v158, 0
  %v239 = vand.u32 %v158, 2139095040
  %v240 = vshrl.u32 %v239, 23
  %v241 = vsub.s32 %v240, 127
  %v242 = vand.u32 2147483647, %v158
  %v243 = vand.u32 %v242, 8388607
  %v244 = vor.u32 %v243, 8388608
  %v245 = vsub.s32 0, %v244
  %v246 = vadd.s32 %v241, 1
  %vm247 = vcmp.gt.s32.totalorder %v246, 0
  %v248 = vsel %vm247, %v246, 0
  %v249 = vshrl.u32 %v248, 5
  %v250 = vand.u32 %v248, 31
  %v251 = vsub.s32 32, %v250
  %v252 = vshrl.u32 683565275, %v251
  %v253 = vshll.u32 683565275, %v250
  %v254 = vshrl.u32 2475754826, %v251
  %v255 = vor.u32 %v253, %v254
  %v256 = vshll.u32 2475754826, %v250
  %v257 = vshrl.u32 2131351028, %v251
  %v258 = vor.u32 %v256, %v257
  %v259 = vshll.u32 2131351028, %v250
  %v260 = vshrl.u32 2102212464, %v251
  %v261 = vor.u32 %v259, %v260
  %v262 = vshll.u32 2102212464, %v250
  %v263 = vshrl.u32 920167782, %v251
  %v264 = vor.u32 %v262, %v263
  %v265 = vshll.u32 920167782, %v250
  %v266 = vshrl.u32 1326507024, %v251
  %v267 = vor.u32 %v265, %v266
  %vm268 = vcmp.lt.s32.totalorder %v249, 1
  %vm269 = vcmp.lt.s32.totalorder %v249, 2
  %vm270 = vcmp.lt.s32.totalorder %v249, 3
  %vm271 = vcmp.lt.s32.totalorder %v249, 4
  %v272 = vsel %vm268, %v252, %v255
  %v273 = vsel %vm271, %v261, 2102212464
  %v274 = vsel %vm270, %v258, %v273
  %v275 = vsel %vm269, %v272, %v274
  %v276 = vsel %vm268, %v255, %v258
  %v277 = vsel %vm271, %v264, 920167782
  %v278 = vsel %vm270, %v261, %v277
  %v279 = vsel %vm269, %v276, %v278
  %v280 = vsel %vm268, %v258, %v261
  %v281 = vsel %vm271, %v267, 1326507024
  %v282 = vsel %vm270, %v264, %v281
  %v283 = vsel %vm269, %v280, %v282
  %v284 = vshll.u32 %v244, 8
  %v285 = vmul.u32.u64.compose %v284, %v283
  %v286 = vextract.low.u32 %v285
  %v287 = vextract.high.u32 %v285
  %v288 = vmul.u32.u64.compose %v284, %v279
  %v289 = vextract.low.u32 %v288
  %v290 = vextract.high.u32 %v288
  %v291 = vmul.u32 %v284, %v275
  %v292 = vadd.s32 %v287, %v289
  %vm293 = vc.u32 %v287, %v289
  %v294 = vadd.s32 %v290, 1
  %v295 = vsel %vm293, %v294, %v290
  %v296 = vadd.s32 %v291, %v295
  %v297 = vadd.s32 %v296, 536870912
  %v298 = vshrl.u32 %v297, 30
  %v299 = vshll.u32 %v298, 30
  %v300 = vsub.s32 %v296, %v299
  %vm301 = vcmp.lt.s32.totalorder %v300, 0
  %v302 = vsub.s32 0, %v300
  %v303 = vsel %vm301, %v302, %v300
  %v304 = vclz %v303
  %v305 = vsub.s32 %v304, 2
  %vm306 = vcmp.gt.s32.totalorder 0, %v305
  %v307 = vsel %vm306, 0, %v305
  %v308 = vsub.s32 32, %v307
  %v309 = vshll.u32 %v300, %v307
  %v310 = vshrl.u32 %v292, %v308
  %v311 = vor.u32 %v309, %v310
  %v312 = vsub.s32 4294967266, %v307
  %v313 = vadd.s32 %v312, 127
  %v314 = vshll.u32 %v313, 23
  %v315 = vor.u32 4788187, %v314
  %v316 = vand.u32 2147483647, %v315
  %v318 = vcvt.s32.f32 %v311
  %v319 = vmul.f32 %v318, %v316
  %v320 = vxor.u32 %v319, 2147483648
  %v321 = vsel %vm238, %v320, %v319
  %v322 = vsub.s32 4, %v298
  %v323 = vsel %vm238, %v322, %v298
  %v324 = vsel %vm237, %v158, %v321
  %v325 = vsel %vm237, 0, %v323
  %v326 = vcosq.f32.pop %v324
  %v327 = vsinq.f32.pop %v324
  %vm328 = vweird.f32 %v158
  %v329 = vadd.s32 %v325, 3
  %v330 = vand.u32 %v329, 3
  %vm331 = vcmp.lt.s32.totalorder %v330, 2
  %vm332 = vcmp.eq.s32.totalorder %v330, 0
  %v333 = vxor.u32 %v327, 2147483648
  %v334 = vsel %vm332, %v326, %v333
  %vm335 = vcmp.eq.s32.totalorder %v330, 2
  %v336 = vxor.u32 %v326, 2147483648
  %v337 = vsel %vm335, %v336, %v327
  %v338 = vsel %vm331, %v334, %v337
  %v339 = vsel %vm328, nan, %v338
  %v340 = vand.u32 2147483647, %v163
  %vm341 = vcmp.le.f32.partialorder %v340, 0.7853982
  %vm342 = vcmp.lt.s32.totalorder %v163, 0
  %v343 = vand.u32 %v163, 2139095040
  %v344 = vshrl.u32 %v343, 23
  %v345 = vsub.s32 %v344, 127
  %v346 = vand.u32 2147483647, %v163
  %v347 = vand.u32 %v346, 8388607
  %v348 = vor.u32 %v347, 8388608
  %v349 = vsub.s32 0, %v348
  %v350 = vadd.s32 %v345, 1
  %vm351 = vcmp.gt.s32.totalorder %v350, 0
  %v352 = vsel %vm351, %v350, 0
  %v353 = vshrl.u32 %v352, 5
  %v354 = vand.u32 %v352, 31
  %v355 = vsub.s32 32, %v354
  %v356 = vshrl.u32 683565275, %v355
  %v357 = vshll.u32 683565275, %v354
  %v358 = vshrl.u32 2475754826, %v355
  %v359 = vor.u32 %v357, %v358
  %v360 = vshll.u32 2475754826, %v354
  %v361 = vshrl.u32 2131351028, %v355
  %v362 = vor.u32 %v360, %v361
  %v363 = vshll.u32 2131351028, %v354
  %v364 = vshrl.u32 2102212464, %v355
  %v365 = vor.u32 %v363, %v364
  %v366 = vshll.u32 2102212464, %v354
  %v367 = vshrl.u32 920167782, %v355
  %v368 = vor.u32 %v366, %v367
  %v369 = vshll.u32 920167782, %v354
  %v370 = vshrl.u32 1326507024, %v355
  %v371 = vor.u32 %v369, %v370
  %vm372 = vcmp.lt.s32.totalorder %v353, 1
  %vm373 = vcmp.lt.s32.totalorder %v353, 2
  %vm374 = vcmp.lt.s32.totalorder %v353, 3
  %vm375 = vcmp.lt.s32.totalorder %v353, 4
  %v376 = vsel %vm372, %v356, %v359
  %v377 = vsel %vm375, %v365, 2102212464
  %v378 = vsel %vm374, %v362, %v377
  %v379 = vsel %vm373, %v376, %v378
  %v380 = vsel %vm372, %v359, %v362
  %v381 = vsel %vm375, %v368, 920167782
  %v382 = vsel %vm374, %v365, %v381
  %v383 = vsel %vm373, %v380, %v382
  %v384 = vsel %vm372, %v362, %v365
  %v385 = vsel %vm375, %v371, 1326507024
  %v386 = vsel %vm374, %v368, %v385
  %v387 = vsel %vm373, %v384, %v386
  %v388 = vshll.u32 %v348, 8
  %v389 = vmul.u32.u64.compose %v388, %v387
  %v390 = vextract.low.u32 %v389
  %v391 = vextract.high.u32 %v389
  %v392 = vmul.u32.u64.compose %v388, %v383
  %v393 = vextract.low.u32 %v392
  %v394 = vextract.high.u32 %v392
  %v395 = vmul.u32 %v388, %v379
  %v396 = vadd.s32 %v391, %v393
  %vm397 = vc.u32 %v391, %v393
  %v398 = vadd.s32 %v394, 1
  %v399 = vsel %vm397, %v398, %v394
  %v400 = vadd.s32 %v395, %v399
  %v401 = vadd.s32 %v400, 536870912
  %v402 = vshrl.u32 %v401, 30
  %v403 = vshll.u32 %v402, 30
  %v404 = vsub.s32 %v400, %v403
  %vm405 = vcmp.lt.s32.totalorder %v404, 0
  %v406 = vsub.s32 0, %v404
  %v407 = vsel %vm405, %v406, %v404
  %v408 = vclz %v407
  %v409 = vsub.s32 %v408, 2
  %vm410 = vcmp.gt.s32.totalorder 0, %v409
  %v411 = vsel %vm410, 0, %v409
  %v412 = vsub.s32 32, %v411
  %v413 = vshll.u32 %v404, %v411
  %v414 = vshrl.u32 %v396, %v412
  %v415 = vor.u32 %v413, %v414
  %v416 = vsub.s32 4294967266, %v411
  %v417 = vadd.s32 %v416, 127
  %v418 = vshll.u32 %v417, 23
  %v419 = vor.u32 4788187, %v418
  %v420 = vand.u32 2147483647, %v419
  %v422 = vcvt.s32.f32 %v415
  %v423 = vmul.f32 %v422, %v420
  %v424 = vxor.u32 %v423, 2147483648
  %v425 = vsel %vm342, %v424, %v423
  %v426 = vsub.s32 4, %v402
  %v427 = vsel %vm342, %v426, %v402
  %v428 = vsel %vm341, %v163, %v425
  %v429 = vsel %vm341, 0, %v427
  %v430 = vcosq.f32.pop %v428
  %v431 = vsinq.f32.pop %v428
  %vm432 = vweird.f32 %v163
  %v433 = vadd.s32 %v429, 3
  %v434 = vand.u32 %v433, 3
  %vm435 = vcmp.lt.s32.totalorder %v434, 2
  %vm436 = vcmp.eq.s32.totalorder %v434, 0
  %v437 = vxor.u32 %v431, 2147483648
  %v438 = vsel %vm436, %v430, %v437
  %vm439 = vcmp.eq.s32.totalorder %v434, 2
  %v440 = vxor.u32 %v430, 2147483648
  %v441 = vsel %vm439, %v440, %v431
  %v442 = vsel %vm435, %v438, %v441
  %v443 = vsel %vm432, nan, %v442
  %v444 = vand.u32 2147483647, %v168
  %vm445 = vcmp.le.f32.partialorder %v444, 0.7853982
  %vm446 = vcmp.lt.s32.totalorder %v168, 0
  %v447 = vand.u32 %v168, 2139095040
  %v448 = vshrl.u32 %v447, 23
  %v449 = vsub.s32 %v448, 127
  %v450 = vand.u32 2147483647, %v168
  %v451 = vand.u32 %v450, 8388607
  %v452 = vor.u32 %v451, 8388608
  %v453 = vsub.s32 0, %v452
  %v454 = vadd.s32 %v449, 1
  %vm455 = vcmp.gt.s32.totalorder %v454, 0
  %v456 = vsel %vm455, %v454, 0
  %v457 = vshrl.u32 %v456, 5
  %v458 = vand.u32 %v456, 31
  %v459 = vsub.s32 32, %v458
  %v460 = vshrl.u32 683565275, %v459
  %v461 = vshll.u32 683565275, %v458
  %v462 = vshrl.u32 2475754826, %v459
  %v463 = vor.u32 %v461, %v462
  %v464 = vshll.u32 2475754826, %v458
  %v465 = vshrl.u32 2131351028, %v459
  %v466 = vor.u32 %v464, %v465
  %v467 = vshll.u32 2131351028, %v458
  %v468 = vshrl.u32 2102212464, %v459
  %v469 = vor.u32 %v467, %v468
  %v470 = vshll.u32 2102212464, %v458
  %v471 = vshrl.u32 920167782, %v459
  %v472 = vor.u32 %v470, %v471
  %v473 = vshll.u32 920167782, %v458
  %v474 = vshrl.u32 1326507024, %v459
  %v475 = vor.u32 %v473, %v474
  %vm476 = vcmp.lt.s32.totalorder %v457, 1
  %vm477 = vcmp.lt.s32.totalorder %v457, 2
  %vm478 = vcmp.lt.s32.totalorder %v457, 3
  %vm479 = vcmp.lt.s32.totalorder %v457, 4
  %v480 = vsel %vm476, %v460, %v463
  %v481 = vsel %vm479, %v469, 2102212464
  %v482 = vsel %vm478, %v466, %v481
  %v483 = vsel %vm477, %v480, %v482
  %v484 = vsel %vm476, %v463, %v466
  %v485 = vsel %vm479, %v472, 920167782
  %v486 = vsel %vm478, %v469, %v485
  %v487 = vsel %vm477, %v484, %v486
  %v488 = vsel %vm476, %v466, %v469
  %v489 = vsel %vm479, %v475, 1326507024
  %v490 = vsel %vm478, %v472, %v489
  %v491 = vsel %vm477, %v488, %v490
  %v492 = vshll.u32 %v452, 8
  %v493 = vmul.u32.u64.compose %v492, %v491
  %v494 = vextract.low.u32 %v493
  %v495 = vextract.high.u32 %v493
  %v496 = vmul.u32.u64.compose %v492, %v487
  %v497 = vextract.low.u32 %v496
  %v498 = vextract.high.u32 %v496
  %v499 = vmul.u32 %v492, %v483
  %v500 = vadd.s32 %v495, %v497
  %vm501 = vc.u32 %v495, %v497
  %v502 = vadd.s32 %v498, 1
  %v503 = vsel %vm501, %v502, %v498
  %v504 = vadd.s32 %v499, %v503
  %v505 = vadd.s32 %v504, 536870912
  %v506 = vshrl.u32 %v505, 30
  %v507 = vshll.u32 %v506, 30
  %v508 = vsub.s32 %v504, %v507
  %vm509 = vcmp.lt.s32.totalorder %v508, 0
  %v510 = vsub.s32 0, %v508
  %v511 = vsel %vm509, %v510, %v508
  %v512 = vclz %v511
  %v513 = vsub.s32 %v512, 2
  %vm514 = vcmp.gt.s32.totalorder 0, %v513
  %v515 = vsel %vm514, 0, %v513
  %v516 = vsub.s32 32, %v515
  %v517 = vshll.u32 %v508, %v515
  %v518 = vshrl.u32 %v500, %v516
  %v519 = vor.u32 %v517, %v518
  %v520 = vsub.s32 4294967266, %v515
  %v521 = vadd.s32 %v520, 127
  %v522 = vshll.u32 %v521, 23
  %v523 = vor.u32 4788187, %v522
  %v524 = vand.u32 2147483647, %v523
  %v526 = vcvt.s32.f32 %v519
  %v527 = vmul.f32 %v526, %v524
  %v528 = vxor.u32 %v527, 2147483648
  %v529 = vsel %vm446, %v528, %v527
  %v530 = vsub.s32 4, %v506
  %v531 = vsel %vm446, %v530, %v506
  %v532 = vsel %vm445, %v168, %v529
  %v533 = vsel %vm445, 0, %v531
  %v534 = vcosq.f32.pop %v532
  %v535 = vsinq.f32.pop %v532
  %vm536 = vweird.f32 %v168
  %v537 = vadd.s32 %v533, 3
  %v538 = vand.u32 %v537, 3
  %vm539 = vcmp.lt.s32.totalorder %v538, 2
  %vm540 = vcmp.eq.s32.totalorder %v538, 0
  %v541 = vxor.u32 %v535, 2147483648
  %v542 = vsel %vm540, %v534, %v541
  %vm543 = vcmp.eq.s32.totalorder %v538, 2
  %v544 = vxor.u32 %v534, 2147483648
  %v545 = vsel %vm543, %v544, %v535
  %v546 = vsel %vm539, %v542, %v545
  %v547 = vsel %vm536, nan, %v546
  %v548 = vand.u32 2147483647, %v173
  %vm549 = vcmp.le.f32.partialorder %v548, 0.7853982
  %vm550 = vcmp.lt.s32.totalorder %v173, 0
  %v551 = vand.u32 %v173, 2139095040
  %v552 = vshrl.u32 %v551, 23
  %v553 = vsub.s32 %v552, 127
  %v554 = vand.u32 2147483647, %v173
  %v555 = vand.u32 %v554, 8388607
  %v556 = vor.u32 %v555, 8388608
  %v557 = vsub.s32 0, %v556
  %v558 = vadd.s32 %v553, 1
  %vm559 = vcmp.gt.s32.totalorder %v558, 0
  %v560 = vsel %vm559, %v558, 0
  %v561 = vshrl.u32 %v560, 5
  %v562 = vand.u32 %v560, 31
  %v563 = vsub.s32 32, %v562
  %v564 = vshrl.u32 683565275, %v563
  %v565 = vshll.u32 683565275, %v562
  %v566 = vshrl.u32 2475754826, %v563
  %v567 = vor.u32 %v565, %v566
  %v568 = vshll.u32 2475754826, %v562
  %v569 = vshrl.u32 2131351028, %v563
  %v570 = vor.u32 %v568, %v569
  %v571 = vshll.u32 2131351028, %v562
  %v572 = vshrl.u32 2102212464, %v563
  %v573 = vor.u32 %v571, %v572
  %v574 = vshll.u32 2102212464, %v562
  %v575 = vshrl.u32 920167782, %v563
  %v576 = vor.u32 %v574, %v575
  %v577 = vshll.u32 920167782, %v562
  %v578 = vshrl.u32 1326507024, %v563
  %v579 = vor.u32 %v577, %v578
  %vm580 = vcmp.lt.s32.totalorder %v561, 1
  %vm581 = vcmp.lt.s32.totalorder %v561, 2
  %vm582 = vcmp.lt.s32.totalorder %v561, 3
  %vm583 = vcmp.lt.s32.totalorder %v561, 4
  %v584 = vsel %vm580, %v564, %v567
  %v585 = vsel %vm583, %v573, 2102212464
  %v586 = vsel %vm582, %v570, %v585
  %v587 = vsel %vm581, %v584, %v586
  %v588 = vsel %vm580, %v567, %v570
  %v589 = vsel %vm583, %v576, 920167782
  %v590 = vsel %vm582, %v573, %v589
  %v591 = vsel %vm581, %v588, %v590
  %v592 = vsel %vm580, %v570, %v573
  %v593 = vsel %vm583, %v579, 1326507024
  %v594 = vsel %vm582, %v576, %v593
  %v595 = vsel %vm581, %v592, %v594
  %v596 = vshll.u32 %v556, 8
  %v597 = vmul.u32.u64.compose %v596, %v595
  %v598 = vextract.low.u32 %v597
  %v599 = vextract.high.u32 %v597
  %v600 = vmul.u32.u64.compose %v596, %v591
  %v601 = vextract.low.u32 %v600
  %v602 = vextract.high.u32 %v600
  %v603 = vmul.u32 %v596, %v587
  %v604 = vadd.s32 %v599, %v601
  %vm605 = vc.u32 %v599, %v601
  %v606 = vadd.s32 %v602, 1
  %v607 = vsel %vm605, %v606, %v602
  %v608 = vadd.s32 %v603, %v607
  %v609 = vadd.s32 %v608, 536870912
  %v610 = vshrl.u32 %v609, 30
  %v611 = vshll.u32 %v610, 30
  %v612 = vsub.s32 %v608, %v611
  %vm613 = vcmp.lt.s32.totalorder %v612, 0
  %v614 = vsub.s32 0, %v612
  %v615 = vsel %vm613, %v614, %v612
  %v616 = vclz %v615
  %v617 = vsub.s32 %v616, 2
  %vm618 = vcmp.gt.s32.totalorder 0, %v617
  %v619 = vsel %vm618, 0, %v617
  %v620 = vsub.s32 32, %v619
  %v621 = vshll.u32 %v612, %v619
  %v622 = vshrl.u32 %v604, %v620
  %v623 = vor.u32 %v621, %v622
  %v624 = vsub.s32 4294967266, %v619
  %v625 = vadd.s32 %v624, 127
  %v626 = vshll.u32 %v625, 23
  %v627 = vor.u32 4788187, %v626
  %v628 = vand.u32 2147483647, %v627
  %v630 = vcvt.s32.f32 %v623
  %v631 = vmul.f32 %v630, %v628
  %v632 = vxor.u32 %v631, 2147483648
  %v633 = vsel %vm550, %v632, %v631
  %v634 = vsub.s32 4, %v610
  %v635 = vsel %vm550, %v634, %v610
  %v636 = vsel %vm549, %v173, %v633
  %v637 = vsel %vm549, 0, %v635
  %v638 = vcosq.f32.pop %v636
  %v639 = vsinq.f32.pop %v636
  %vm640 = vweird.f32 %v173
  %v641 = vadd.s32 %v637, 3
  %v642 = vand.u32 %v641, 3
  %vm643 = vcmp.lt.s32.totalorder %v642, 2
  %vm644 = vcmp.eq.s32.totalorder %v642, 0
  %v645 = vxor.u32 %v639, 2147483648
  %v646 = vsel %vm644, %v638, %v645
  %vm647 = vcmp.eq.s32.totalorder %v642, 2
  %v648 = vxor.u32 %v638, 2147483648
  %v649 = vsel %vm647, %v648, %v639
  %v650 = vsel %vm643, %v646, %v649
  %v651 = vsel %vm640, nan, %v650
  %v652 = vand.u32 2147483647, %v178
  %vm653 = vcmp.le.f32.partialorder %v652, 0.7853982
  %vm654 = vcmp.lt.s32.totalorder %v178, 0
  %v655 = vand.u32 %v178, 2139095040
  %v656 = vshrl.u32 %v655, 23
  %v657 = vsub.s32 %v656, 127
  %v658 = vand.u32 2147483647, %v178
  %v659 = vand.u32 %v658, 8388607
  %v660 = vor.u32 %v659, 8388608
  %v661 = vsub.s32 0, %v660
  %v662 = vadd.s32 %v657, 1
  %vm663 = vcmp.gt.s32.totalorder %v662, 0
  %v664 = vsel %vm663, %v662, 0
  %v665 = vshrl.u32 %v664, 5
  %v666 = vand.u32 %v664, 31
  %v667 = vsub.s32 32, %v666
  %v668 = vshrl.u32 683565275, %v667
  %v669 = vshll.u32 683565275, %v666
  %v670 = vshrl.u32 2475754826, %v667
  %v671 = vor.u32 %v669, %v670
  %v672 = vshll.u32 2475754826, %v666
  %v673 = vshrl.u32 2131351028, %v667
  %v674 = vor.u32 %v672, %v673
  %v675 = vshll.u32 2131351028, %v666
  %v676 = vshrl.u32 2102212464, %v667
  %v677 = vor.u32 %v675, %v676
  %v678 = vshll.u32 2102212464, %v666
  %v679 = vshrl.u32 920167782, %v667
  %v680 = vor.u32 %v678, %v679
  %v681 = vshll.u32 920167782, %v666
  %v682 = vshrl.u32 1326507024, %v667
  %v683 = vor.u32 %v681, %v682
  %vm684 = vcmp.lt.s32.totalorder %v665, 1
  %vm685 = vcmp.lt.s32.totalorder %v665, 2
  %vm686 = vcmp.lt.s32.totalorder %v665, 3
  %vm687 = vcmp.lt.s32.totalorder %v665, 4
  %v688 = vsel %vm684, %v668, %v671
  %v689 = vsel %vm687, %v677, 2102212464
  %v690 = vsel %vm686, %v674, %v689
  %v691 = vsel %vm685, %v688, %v690
  %v692 = vsel %vm684, %v671, %v674
  %v693 = vsel %vm687, %v680, 920167782
  %v694 = vsel %vm686, %v677, %v693
  %v695 = vsel %vm685, %v692, %v694
  %v696 = vsel %vm684, %v674, %v677
  %v697 = vsel %vm687, %v683, 1326507024
  %v698 = vsel %vm686, %v680, %v697
  %v699 = vsel %vm685, %v696, %v698
  %v700 = vshll.u32 %v660, 8
  %v701 = vmul.u32.u64.compose %v700, %v699
  %v702 = vextract.low.u32 %v701
  %v703 = vextract.high.u32 %v701
  %v704 = vmul.u32.u64.compose %v700, %v695
  %v705 = vextract.low.u32 %v704
  %v706 = vextract.high.u32 %v704
  %v707 = vmul.u32 %v700, %v691
  %v708 = vadd.s32 %v703, %v705
  %vm709 = vc.u32 %v703, %v705
  %v710 = vadd.s32 %v706, 1
  %v711 = vsel %vm709, %v710, %v706
  %v712 = vadd.s32 %v707, %v711
  %v713 = vadd.s32 %v712, 536870912
  %v714 = vshrl.u32 %v713, 30
  %v715 = vshll.u32 %v714, 30
  %v716 = vsub.s32 %v712, %v715
  %vm717 = vcmp.lt.s32.totalorder %v716, 0
  %v718 = vsub.s32 0, %v716
  %v719 = vsel %vm717, %v718, %v716
  %v720 = vclz %v719
  %v721 = vsub.s32 %v720, 2
  %vm722 = vcmp.gt.s32.totalorder 0, %v721
  %v723 = vsel %vm722, 0, %v721
  %v724 = vsub.s32 32, %v723
  %v725 = vshll.u32 %v716, %v723
  %v726 = vshrl.u32 %v708, %v724
  %v727 = vor.u32 %v725, %v726
  %v728 = vsub.s32 4294967266, %v723
  %v729 = vadd.s32 %v728, 127
  %v730 = vshll.u32 %v729, 23
  %v731 = vor.u32 4788187, %v730
  %v732 = vand.u32 2147483647, %v731
  %v734 = vcvt.s32.f32 %v727
  %v735 = vmul.f32 %v734, %v732
  %v736 = vxor.u32 %v735, 2147483648
  %v737 = vsel %vm654, %v736, %v735
  %v738 = vsub.s32 4, %v714
  %v739 = vsel %vm654, %v738, %v714
  %v740 = vsel %vm653, %v178, %v737
  %v741 = vsel %vm653, 0, %v739
  %v742 = vcosq.f32.pop %v740
  %v743 = vsinq.f32.pop %v740
  %vm744 = vweird.f32 %v178
  %v745 = vadd.s32 %v741, 3
  %v746 = vand.u32 %v745, 3
  %vm747 = vcmp.lt.s32.totalorder %v746, 2
  %vm748 = vcmp.eq.s32.totalorder %v746, 0
  %v749 = vxor.u32 %v743, 2147483648
  %v750 = vsel %vm748, %v742, %v749
  %vm751 = vcmp.eq.s32.totalorder %v746, 2
  %v752 = vxor.u32 %v742, 2147483648
  %v753 = vsel %vm751, %v752, %v743
  %v754 = vsel %vm747, %v750, %v753
  %v755 = vsel %vm744, nan, %v754
  %v756 = vand.u32 2147483647, %v183
  %vm757 = vcmp.le.f32.partialorder %v756, 0.7853982
  %vm758 = vcmp.lt.s32.totalorder %v183, 0
  %v759 = vand.u32 %v183, 2139095040
  %v760 = vshrl.u32 %v759, 23
  %v761 = vsub.s32 %v760, 127
  %v762 = vand.u32 2147483647, %v183
  %v763 = vand.u32 %v762, 8388607
  %v764 = vor.u32 %v763, 8388608
  %v765 = vsub.s32 0, %v764
  %v766 = vadd.s32 %v761, 1
  %vm767 = vcmp.gt.s32.totalorder %v766, 0
  %v768 = vsel %vm767, %v766, 0
  %v769 = vshrl.u32 %v768, 5
  %v770 = vand.u32 %v768, 31
  %v771 = vsub.s32 32, %v770
  %v772 = vshrl.u32 683565275, %v771
  %v773 = vshll.u32 683565275, %v770
  %v774 = vshrl.u32 2475754826, %v771
  %v775 = vor.u32 %v773, %v774
  %v776 = vshll.u32 2475754826, %v770
  %v777 = vshrl.u32 2131351028, %v771
  %v778 = vor.u32 %v776, %v777
  %v779 = vshll.u32 2131351028, %v770
  %v780 = vshrl.u32 2102212464, %v771
  %v781 = vor.u32 %v779, %v780
  %v782 = vshll.u32 2102212464, %v770
  %v783 = vshrl.u32 920167782, %v771
  %v784 = vor.u32 %v782, %v783
  %v785 = vshll.u32 920167782, %v770
  %v786 = vshrl.u32 1326507024, %v771
  %v787 = vor.u32 %v785, %v786
  %vm788 = vcmp.lt.s32.totalorder %v769, 1
  %vm789 = vcmp.lt.s32.totalorder %v769, 2
  %vm790 = vcmp.lt.s32.totalorder %v769, 3
  %vm791 = vcmp.lt.s32.totalorder %v769, 4
  %v792 = vsel %vm788, %v772, %v775
  %v793 = vsel %vm791, %v781, 2102212464
  %v794 = vsel %vm790, %v778, %v793
  %v795 = vsel %vm789, %v792, %v794
  %v796 = vsel %vm788, %v775, %v778
  %v797 = vsel %vm791, %v784, 920167782
  %v798 = vsel %vm790, %v781, %v797
  %v799 = vsel %vm789, %v796, %v798
  %v800 = vsel %vm788, %v778, %v781
  %v801 = vsel %vm791, %v787, 1326507024
  %v802 = vsel %vm790, %v784, %v801
  %v803 = vsel %vm789, %v800, %v802
  %v804 = vshll.u32 %v764, 8
  %v805 = vmul.u32.u64.compose %v804, %v803
  %v806 = vextract.low.u32 %v805
  %v807 = vextract.high.u32 %v805
  %v808 = vmul.u32.u64.compose %v804, %v799
  %v809 = vextract.low.u32 %v808
  %v810 = vextract.high.u32 %v808
  %v811 = vmul.u32 %v804, %v795
  %v812 = vadd.s32 %v807, %v809
  %vm813 = vc.u32 %v807, %v809
  %v814 = vadd.s32 %v810, 1
  %v815 = vsel %vm813, %v814, %v810
  %v816 = vadd.s32 %v811, %v815
  %v817 = vadd.s32 %v816, 536870912
  %v818 = vshrl.u32 %v817, 30
  %v819 = vshll.u32 %v818, 30
  %v820 = vsub.s32 %v816, %v819
  %vm821 = vcmp.lt.s32.totalorder %v820, 0
  %v822 = vsub.s32 0, %v820
  %v823 = vsel %vm821, %v822, %v820
  %v824 = vclz %v823
  %v825 = vsub.s32 %v824, 2
  %vm826 = vcmp.gt.s32.totalorder 0, %v825
  %v827 = vsel %vm826, 0, %v825
  %v828 = vsub.s32 32, %v827
  %v829 = vshll.u32 %v820, %v827
  %v830 = vshrl.u32 %v812, %v828
  %v831 = vor.u32 %v829, %v830
  %v832 = vsub.s32 4294967266, %v827
  %v833 = vadd.s32 %v832, 127
  %v834 = vshll.u32 %v833, 23
  %v835 = vor.u32 4788187, %v834
  %v836 = vand.u32 2147483647, %v835
  %v838 = vcvt.s32.f32 %v831
  %v839 = vmul.f32 %v838, %v836
  %v840 = vxor.u32 %v839, 2147483648
  %v841 = vsel %vm758, %v840, %v839
  %v842 = vsub.s32 4, %v818
  %v843 = vsel %vm758, %v842, %v818
  %v844 = vsel %vm757, %v183, %v841
  %v845 = vsel %vm757, 0, %v843
  %v846 = vcosq.f32.pop %v844
  %v847 = vsinq.f32.pop %v844
  %vm848 = vweird.f32 %v183
  %v849 = vadd.s32 %v845, 3
  %v850 = vand.u32 %v849, 3
  %vm851 = vcmp.lt.s32.totalorder %v850, 2
  %vm852 = vcmp.eq.s32.totalorder %v850, 0
  %v853 = vxor.u32 %v847, 2147483648
  %v854 = vsel %vm852, %v846, %v853
  %vm855 = vcmp.eq.s32.totalorder %v850, 2
  %v856 = vxor.u32 %v846, 2147483648
  %v857 = vsel %vm855, %v856, %v847
  %v858 = vsel %vm851, %v854, %v857
  %v859 = vsel %vm848, nan, %v858
  %v860 = vand.u32 2147483647, %v188
  %vm861 = vcmp.le.f32.partialorder %v860, 0.7853982
  %vm862 = vcmp.lt.s32.totalorder %v188, 0
  %v863 = vand.u32 %v188, 2139095040
  %v864 = vshrl.u32 %v863, 23
  %v865 = vsub.s32 %v864, 127
  %v866 = vand.u32 2147483647, %v188
  %v867 = vand.u32 %v866, 8388607
  %v868 = vor.u32 %v867, 8388608
  %v869 = vsub.s32 0, %v868
  %v870 = vadd.s32 %v865, 1
  %vm871 = vcmp.gt.s32.totalorder %v870, 0
  %v872 = vsel %vm871, %v870, 0
  %v873 = vshrl.u32 %v872, 5
  %v874 = vand.u32 %v872, 31
  %v875 = vsub.s32 32, %v874
  %v876 = vshrl.u32 683565275, %v875
  %v877 = vshll.u32 683565275, %v874
  %v878 = vshrl.u32 2475754826, %v875
  %v879 = vor.u32 %v877, %v878
  %v880 = vshll.u32 2475754826, %v874
  %v881 = vshrl.u32 2131351028, %v875
  %v882 = vor.u32 %v880, %v881
  %v883 = vshll.u32 2131351028, %v874
  %v884 = vshrl.u32 2102212464, %v875
  %v885 = vor.u32 %v883, %v884
  %v886 = vshll.u32 2102212464, %v874
  %v887 = vshrl.u32 920167782, %v875
  %v888 = vor.u32 %v886, %v887
  %v889 = vshll.u32 920167782, %v874
  %v890 = vshrl.u32 1326507024, %v875
  %v891 = vor.u32 %v889, %v890
  %vm892 = vcmp.lt.s32.totalorder %v873, 1
  %vm893 = vcmp.lt.s32.totalorder %v873, 2
  %vm894 = vcmp.lt.s32.totalorder %v873, 3
  %vm895 = vcmp.lt.s32.totalorder %v873, 4
  %v896 = vsel %vm892, %v876, %v879
  %v897 = vsel %vm895, %v885, 2102212464
  %v898 = vsel %vm894, %v882, %v897
  %v899 = vsel %vm893, %v896, %v898
  %v900 = vsel %vm892, %v879, %v882
  %v901 = vsel %vm895, %v888, 920167782
  %v902 = vsel %vm894, %v885, %v901
  %v903 = vsel %vm893, %v900, %v902
  %v904 = vsel %vm892, %v882, %v885
  %v905 = vsel %vm895, %v891, 1326507024
  %v906 = vsel %vm894, %v888, %v905
  %v907 = vsel %vm893, %v904, %v906
  %v908 = vshll.u32 %v868, 8
  %v909 = vmul.u32.u64.compose %v908, %v907
  %v910 = vextract.low.u32 %v909
  %v911 = vextract.high.u32 %v909
  %v912 = vmul.u32.u64.compose %v908, %v903
  %v913 = vextract.low.u32 %v912
  %v914 = vextract.high.u32 %v912
  %v915 = vmul.u32 %v908, %v899
  %v916 = vadd.s32 %v911, %v913
  %vm917 = vc.u32 %v911, %v913
  %v918 = vadd.s32 %v914, 1
  %v919 = vsel %vm917, %v918, %v914
  %v920 = vadd.s32 %v915, %v919
  %v921 = vadd.s32 %v920, 536870912
  %v922 = vshrl.u32 %v921, 30
  %v923 = vshll.u32 %v922, 30
  %v924 = vsub.s32 %v920, %v923
  %vm925 = vcmp.lt.s32.totalorder %v924, 0
  %v926 = vsub.s32 0, %v924
  %v927 = vsel %vm925, %v926, %v924
  %v928 = vclz %v927
  %v929 = vsub.s32 %v928, 2
  %vm930 = vcmp.gt.s32.totalorder 0, %v929
  %v931 = vsel %vm930, 0, %v929
  %v932 = vsub.s32 32, %v931
  %v933 = vshll.u32 %v924, %v931
  %v934 = vshrl.u32 %v916, %v932
  %v935 = vor.u32 %v933, %v934
  %v936 = vsub.s32 4294967266, %v931
  %v937 = vadd.s32 %v936, 127
  %v938 = vshll.u32 %v937, 23
  %v939 = vor.u32 4788187, %v938
  %v940 = vand.u32 2147483647, %v939
  %v942 = vcvt.s32.f32 %v935
  %v943 = vmul.f32 %v942, %v940
  %v944 = vxor.u32 %v943, 2147483648
  %v945 = vsel %vm862, %v944, %v943
  %v946 = vsub.s32 4, %v922
  %v947 = vsel %vm862, %v946, %v922
  %v948 = vsel %vm861, %v188, %v945
  %v949 = vsel %vm861, 0, %v947
  %v950 = vcosq.f32.pop %v948
  %v951 = vsinq.f32.pop %v948
  %vm952 = vweird.f32 %v188
  %v953 = vadd.s32 %v949, 3
  %v954 = vand.u32 %v953, 3
  %vm955 = vcmp.lt.s32.totalorder %v954, 2
  %vm956 = vcmp.eq.s32.totalorder %v954, 0
  %v957 = vxor.u32 %v951, 2147483648
  %v958 = vsel %vm956, %v950, %v957
  %vm959 = vcmp.eq.s32.totalorder %v954, 2
  %v960 = vxor.u32 %v950, 2147483648
  %v961 = vsel %vm959, %v960, %v951
  %v962 = vsel %vm955, %v958, %v961
  %v963 = vsel %vm952, nan, %v962
  %v964 = vand.u32 2147483647, %v193
  %vm965 = vcmp.le.f32.partialorder %v964, 0.7853982
  %vm966 = vcmp.lt.s32.totalorder %v193, 0
  %v967 = vand.u32 %v193, 2139095040
  %v968 = vshrl.u32 %v967, 23
  %v969 = vsub.s32 %v968, 127
  %v970 = vand.u32 2147483647, %v193
  %v971 = vand.u32 %v970, 8388607
  %v972 = vor.u32 %v971, 8388608
  %v973 = vsub.s32 0, %v972
  %v974 = vadd.s32 %v969, 1
  %vm975 = vcmp.gt.s32.totalorder %v974, 0
  %v976 = vsel %vm975, %v974, 0
  %v977 = vshrl.u32 %v976, 5
  %v978 = vand.u32 %v976, 31
  %v979 = vsub.s32 32, %v978
  %v980 = vshrl.u32 683565275, %v979
  %v981 = vshll.u32 683565275, %v978
  %v982 = vshrl.u32 2475754826, %v979
  %v983 = vor.u32 %v981, %v982
  %v984 = vshll.u32 2475754826, %v978
  %v985 = vshrl.u32 2131351028, %v979
  %v986 = vor.u32 %v984, %v985
  %v987 = vshll.u32 2131351028, %v978
  %v988 = vshrl.u32 2102212464, %v979
  %v989 = vor.u32 %v987, %v988
  %v990 = vshll.u32 2102212464, %v978
  %v991 = vshrl.u32 920167782, %v979
  %v992 = vor.u32 %v990, %v991
  %v993 = vshll.u32 920167782, %v978
  %v994 = vshrl.u32 1326507024, %v979
  %v995 = vor.u32 %v993, %v994
  %vm996 = vcmp.lt.s32.totalorder %v977, 1
  %vm997 = vcmp.lt.s32.totalorder %v977, 2
  %vm998 = vcmp.lt.s32.totalorder %v977, 3
  %vm999 = vcmp.lt.s32.totalorder %v977, 4
  %v1000 = vsel %vm996, %v980, %v983
  %v1001 = vsel %vm999, %v989, 2102212464
  %v1002 = vsel %vm998, %v986, %v1001
  %v1003 = vsel %vm997, %v1000, %v1002
  %v1004 = vsel %vm996, %v983, %v986
  %v1005 = vsel %vm999, %v992, 920167782
  %v1006 = vsel %vm998, %v989, %v1005
  %v1007 = vsel %vm997, %v1004, %v1006
  %v1008 = vsel %vm996, %v986, %v989
  %v1009 = vsel %vm999, %v995, 1326507024
  %v1010 = vsel %vm998, %v992, %v1009
  %v1011 = vsel %vm997, %v1008, %v1010
  %v1012 = vshll.u32 %v972, 8
  %v1013 = vmul.u32.u64.compose %v1012, %v1011
  %v1014 = vextract.low.u32 %v1013
  %v1015 = vextract.high.u32 %v1013
  %v1016 = vmul.u32.u64.compose %v1012, %v1007
  %v1017 = vextract.low.u32 %v1016
  %v1018 = vextract.high.u32 %v1016
  %v1019 = vmul.u32 %v1012, %v1003
  %v1020 = vadd.s32 %v1015, %v1017
  %vm1021 = vc.u32 %v1015, %v1017
  %v1022 = vadd.s32 %v1018, 1
  %v1023 = vsel %vm1021, %v1022, %v1018
  %v1024 = vadd.s32 %v1019, %v1023
  %v1025 = vadd.s32 %v1024, 536870912
  %v1026 = vshrl.u32 %v1025, 30
  %v1027 = vshll.u32 %v1026, 30
  %v1028 = vsub.s32 %v1024, %v1027
  %vm1029 = vcmp.lt.s32.totalorder %v1028, 0
  %v1030 = vsub.s32 0, %v1028
  %v1031 = vsel %vm1029, %v1030, %v1028
  %v1032 = vclz %v1031
  %v1033 = vsub.s32 %v1032, 2
  %vm1034 = vcmp.gt.s32.totalorder 0, %v1033
  %v1035 = vsel %vm1034, 0, %v1033
  %v1036 = vsub.s32 32, %v1035
  %v1037 = vshll.u32 %v1028, %v1035
  %v1038 = vshrl.u32 %v1020, %v1036
  %v1039 = vor.u32 %v1037, %v1038
  %v1040 = vsub.s32 4294967266, %v1035
  %v1041 = vadd.s32 %v1040, 127
  %v1042 = vshll.u32 %v1041, 23
  %v1043 = vor.u32 4788187, %v1042
  %v1044 = vand.u32 2147483647, %v1043
  %v1046 = vcvt.s32.f32 %v1039
  %v1047 = vmul.f32 %v1046, %v1044
  %v1048 = vxor.u32 %v1047, 2147483648
  %v1049 = vsel %vm966, %v1048, %v1047
  %v1050 = vsub.s32 4, %v1026
  %v1051 = vsel %vm966, %v1050, %v1026
  %v1052 = vsel %vm965, %v193, %v1049
  %v1053 = vsel %vm965, 0, %v1051
  %v1054 = vcosq.f32.pop %v1052
  %v1055 = vsinq.f32.pop %v1052
  %vm1056 = vweird.f32 %v193
  %v1057 = vadd.s32 %v1053, 3
  %v1058 = vand.u32 %v1057, 3
  %vm1059 = vcmp.lt.s32.totalorder %v1058, 2
  %vm1060 = vcmp.eq.s32.totalorder %v1058, 0
  %v1061 = vxor.u32 %v1055, 2147483648
  %v1062 = vsel %vm1060, %v1054, %v1061
  %vm1063 = vcmp.eq.s32.totalorder %v1058, 2
  %v1064 = vxor.u32 %v1054, 2147483648
  %v1065 = vsel %vm1063, %v1064, %v1055
  %v1066 = vsel %vm1059, %v1062, %v1065
  %v1067 = vsel %vm1056, nan, %v1066
  %v1068 = vand.u32 2147483647, %v198
  %vm1069 = vcmp.le.f32.partialorder %v1068, 0.7853982
  %vm1070 = vcmp.lt.s32.totalorder %v198, 0
  %v1071 = vand.u32 %v198, 2139095040
  %v1072 = vshrl.u32 %v1071, 23
  %v1073 = vsub.s32 %v1072, 127
  %v1074 = vand.u32 2147483647, %v198
  %v1075 = vand.u32 %v1074, 8388607
  %v1076 = vor.u32 %v1075, 8388608
  %v1077 = vsub.s32 0, %v1076
  %v1078 = vadd.s32 %v1073, 1
  %vm1079 = vcmp.gt.s32.totalorder %v1078, 0
  %v1080 = vsel %vm1079, %v1078, 0
  %v1081 = vshrl.u32 %v1080, 5
  %v1082 = vand.u32 %v1080, 31
  %v1083 = vsub.s32 32, %v1082
  %v1084 = vshrl.u32 683565275, %v1083
  %v1085 = vshll.u32 683565275, %v1082
  %v1086 = vshrl.u32 2475754826, %v1083
  %v1087 = vor.u32 %v1085, %v1086
  %v1088 = vshll.u32 2475754826, %v1082
  %v1089 = vshrl.u32 2131351028, %v1083
  %v1090 = vor.u32 %v1088, %v1089
  %v1091 = vshll.u32 2131351028, %v1082
  %v1092 = vshrl.u32 2102212464, %v1083
  %v1093 = vor.u32 %v1091, %v1092
  %v1094 = vshll.u32 2102212464, %v1082
  %v1095 = vshrl.u32 920167782, %v1083
  %v1096 = vor.u32 %v1094, %v1095
  %v1097 = vshll.u32 920167782, %v1082
  %v1098 = vshrl.u32 1326507024, %v1083
  %v1099 = vor.u32 %v1097, %v1098
  %vm1100 = vcmp.lt.s32.totalorder %v1081, 1
  %vm1101 = vcmp.lt.s32.totalorder %v1081, 2
  %vm1102 = vcmp.lt.s32.totalorder %v1081, 3
  %vm1103 = vcmp.lt.s32.totalorder %v1081, 4
  %v1104 = vsel %vm1100, %v1084, %v1087
  %v1105 = vsel %vm1103, %v1093, 2102212464
  %v1106 = vsel %vm1102, %v1090, %v1105
  %v1107 = vsel %vm1101, %v1104, %v1106
  %v1108 = vsel %vm1100, %v1087, %v1090
  %v1109 = vsel %vm1103, %v1096, 920167782
  %v1110 = vsel %vm1102, %v1093, %v1109
  %v1111 = vsel %vm1101, %v1108, %v1110
  %v1112 = vsel %vm1100, %v1090, %v1093
  %v1113 = vsel %vm1103, %v1099, 1326507024
  %v1114 = vsel %vm1102, %v1096, %v1113
  %v1115 = vsel %vm1101, %v1112, %v1114
  %v1116 = vshll.u32 %v1076, 8
  %v1117 = vmul.u32.u64.compose %v1116, %v1115
  %v1118 = vextract.low.u32 %v1117
  %v1119 = vextract.high.u32 %v1117
  %v1120 = vmul.u32.u64.compose %v1116, %v1111
  %v1121 = vextract.low.u32 %v1120
  %v1122 = vextract.high.u32 %v1120
  %v1123 = vmul.u32 %v1116, %v1107
  %v1124 = vadd.s32 %v1119, %v1121
  %vm1125 = vc.u32 %v1119, %v1121
  %v1126 = vadd.s32 %v1122, 1
  %v1127 = vsel %vm1125, %v1126, %v1122
  %v1128 = vadd.s32 %v1123, %v1127
  %v1129 = vadd.s32 %v1128, 536870912
  %v1130 = vshrl.u32 %v1129, 30
  %v1131 = vshll.u32 %v1130, 30
  %v1132 = vsub.s32 %v1128, %v1131
  %vm1133 = vcmp.lt.s32.totalorder %v1132, 0
  %v1134 = vsub.s32 0, %v1132
  %v1135 = vsel %vm1133, %v1134, %v1132
  %v1136 = vclz %v1135
  %v1137 = vsub.s32 %v1136, 2
  %vm1138 = vcmp.gt.s32.totalorder 0, %v1137
  %v1139 = vsel %vm1138, 0, %v1137
  %v1140 = vsub.s32 32, %v1139
  %v1141 = vshll.u32 %v1132, %v1139
  %v1142 = vshrl.u32 %v1124, %v1140
  %v1143 = vor.u32 %v1141, %v1142
  %v1144 = vsub.s32 4294967266, %v1139
  %v1145 = vadd.s32 %v1144, 127
  %v1146 = vshll.u32 %v1145, 23
  %v1147 = vor.u32 4788187, %v1146
  %v1148 = vand.u32 2147483647, %v1147
  %v1150 = vcvt.s32.f32 %v1143
  %v1151 = vmul.f32 %v1150, %v1148
  %v1152 = vxor.u32 %v1151, 2147483648
  %v1153 = vsel %vm1070, %v1152, %v1151
  %v1154 = vsub.s32 4, %v1130
  %v1155 = vsel %vm1070, %v1154, %v1130
  %v1156 = vsel %vm1069, %v198, %v1153
  %v1157 = vsel %vm1069, 0, %v1155
  %v1158 = vcosq.f32.pop %v1156
  %v1159 = vsinq.f32.pop %v1156
  %vm1160 = vweird.f32 %v198
  %v1161 = vadd.s32 %v1157, 3
  %v1162 = vand.u32 %v1161, 3
  %vm1163 = vcmp.lt.s32.totalorder %v1162, 2
  %vm1164 = vcmp.eq.s32.totalorder %v1162, 0
  %v1165 = vxor.u32 %v1159, 2147483648
  %v1166 = vsel %vm1164, %v1158, %v1165
  %vm1167 = vcmp.eq.s32.totalorder %v1162, 2
  %v1168 = vxor.u32 %v1158, 2147483648
  %v1169 = vsel %vm1167, %v1168, %v1159
  %v1170 = vsel %vm1163, %v1166, %v1169
  %v1171 = vsel %vm1160, nan, %v1170
  %v1172 = vand.u32 2147483647, %v203
  %vm1173 = vcmp.le.f32.partialorder %v1172, 0.7853982
  %vm1174 = vcmp.lt.s32.totalorder %v203, 0
  %v1175 = vand.u32 %v203, 2139095040
  %v1176 = vshrl.u32 %v1175, 23
  %v1177 = vsub.s32 %v1176, 127
  %v1178 = vand.u32 2147483647, %v203
  %v1179 = vand.u32 %v1178, 8388607
  %v1180 = vor.u32 %v1179, 8388608
  %v1181 = vsub.s32 0, %v1180
  %v1182 = vadd.s32 %v1177, 1
  %vm1183 = vcmp.gt.s32.totalorder %v1182, 0
  %v1184 = vsel %vm1183, %v1182, 0
  %v1185 = vshrl.u32 %v1184, 5
  %v1186 = vand.u32 %v1184, 31
  %v1187 = vsub.s32 32, %v1186
  %v1188 = vshrl.u32 683565275, %v1187
  %v1189 = vshll.u32 683565275, %v1186
  %v1190 = vshrl.u32 2475754826, %v1187
  %v1191 = vor.u32 %v1189, %v1190
  %v1192 = vshll.u32 2475754826, %v1186
  %v1193 = vshrl.u32 2131351028, %v1187
  %v1194 = vor.u32 %v1192, %v1193
  %v1195 = vshll.u32 2131351028, %v1186
  %v1196 = vshrl.u32 2102212464, %v1187
  %v1197 = vor.u32 %v1195, %v1196
  %v1198 = vshll.u32 2102212464, %v1186
  %v1199 = vshrl.u32 920167782, %v1187
  %v1200 = vor.u32 %v1198, %v1199
  %v1201 = vshll.u32 920167782, %v1186
  %v1202 = vshrl.u32 1326507024, %v1187
  %v1203 = vor.u32 %v1201, %v1202
  %vm1204 = vcmp.lt.s32.totalorder %v1185, 1
  %vm1205 = vcmp.lt.s32.totalorder %v1185, 2
  %vm1206 = vcmp.lt.s32.totalorder %v1185, 3
  %vm1207 = vcmp.lt.s32.totalorder %v1185, 4
  %v1208 = vsel %vm1204, %v1188, %v1191
  %v1209 = vsel %vm1207, %v1197, 2102212464
  %v1210 = vsel %vm1206, %v1194, %v1209
  %v1211 = vsel %vm1205, %v1208, %v1210
  %v1212 = vsel %vm1204, %v1191, %v1194
  %v1213 = vsel %vm1207, %v1200, 920167782
  %v1214 = vsel %vm1206, %v1197, %v1213
  %v1215 = vsel %vm1205, %v1212, %v1214
  %v1216 = vsel %vm1204, %v1194, %v1197
  %v1217 = vsel %vm1207, %v1203, 1326507024
  %v1218 = vsel %vm1206, %v1200, %v1217
  %v1219 = vsel %vm1205, %v1216, %v1218
  %v1220 = vshll.u32 %v1180, 8
  %v1221 = vmul.u32.u64.compose %v1220, %v1219
  %v1222 = vextract.low.u32 %v1221
  %v1223 = vextract.high.u32 %v1221
  %v1224 = vmul.u32.u64.compose %v1220, %v1215
  %v1225 = vextract.low.u32 %v1224
  %v1226 = vextract.high.u32 %v1224
  %v1227 = vmul.u32 %v1220, %v1211
  %v1228 = vadd.s32 %v1223, %v1225
  %vm1229 = vc.u32 %v1223, %v1225
  %v1230 = vadd.s32 %v1226, 1
  %v1231 = vsel %vm1229, %v1230, %v1226
  %v1232 = vadd.s32 %v1227, %v1231
  %v1233 = vadd.s32 %v1232, 536870912
  %v1234 = vshrl.u32 %v1233, 30
  %v1235 = vshll.u32 %v1234, 30
  %v1236 = vsub.s32 %v1232, %v1235
  %vm1237 = vcmp.lt.s32.totalorder %v1236, 0
  %v1238 = vsub.s32 0, %v1236
  %v1239 = vsel %vm1237, %v1238, %v1236
  %v1240 = vclz %v1239
  %v1241 = vsub.s32 %v1240, 2
  %vm1242 = vcmp.gt.s32.totalorder 0, %v1241
  %v1243 = vsel %vm1242, 0, %v1241
  %v1244 = vsub.s32 32, %v1243
  %v1245 = vshll.u32 %v1236, %v1243
  %v1246 = vshrl.u32 %v1228, %v1244
  %v1247 = vor.u32 %v1245, %v1246
  %v1248 = vsub.s32 4294967266, %v1243
  %v1249 = vadd.s32 %v1248, 127
  %v1250 = vshll.u32 %v1249, 23
  %v1251 = vor.u32 4788187, %v1250
  %v1252 = vand.u32 2147483647, %v1251
  %v1254 = vcvt.s32.f32 %v1247
  %v1255 = vmul.f32 %v1254, %v1252
  %v1256 = vxor.u32 %v1255, 2147483648
  %v1257 = vsel %vm1174, %v1256, %v1255
  %v1258 = vsub.s32 4, %v1234
  %v1259 = vsel %vm1174, %v1258, %v1234
  %v1260 = vsel %vm1173, %v203, %v1257
  %v1261 = vsel %vm1173, 0, %v1259
  %v1262 = vcosq.f32.pop %v1260
  %v1263 = vsinq.f32.pop %v1260
  %vm1264 = vweird.f32 %v203
  %v1265 = vadd.s32 %v1261, 3
  %v1266 = vand.u32 %v1265, 3
  %vm1267 = vcmp.lt.s32.totalorder %v1266, 2
  %vm1268 = vcmp.eq.s32.totalorder %v1266, 0
  %v1269 = vxor.u32 %v1263, 2147483648
  %v1270 = vsel %vm1268, %v1262, %v1269
  %vm1271 = vcmp.eq.s32.totalorder %v1266, 2
  %v1272 = vxor.u32 %v1262, 2147483648
  %v1273 = vsel %vm1271, %v1272, %v1263
  %v1274 = vsel %vm1267, %v1270, %v1273
  %v1275 = vsel %vm1264, nan, %v1274
  %v1276 = vand.u32 2147483647, %v208
  %vm1277 = vcmp.le.f32.partialorder %v1276, 0.7853982
  %vm1278 = vcmp.lt.s32.totalorder %v208, 0
  %v1279 = vand.u32 %v208, 2139095040
  %v1280 = vshrl.u32 %v1279, 23
  %v1281 = vsub.s32 %v1280, 127
  %v1282 = vand.u32 2147483647, %v208
  %v1283 = vand.u32 %v1282, 8388607
  %v1284 = vor.u32 %v1283, 8388608
  %v1285 = vsub.s32 0, %v1284
  %v1286 = vadd.s32 %v1281, 1
  %vm1287 = vcmp.gt.s32.totalorder %v1286, 0
  %v1288 = vsel %vm1287, %v1286, 0
  %v1289 = vshrl.u32 %v1288, 5
  %v1290 = vand.u32 %v1288, 31
  %v1291 = vsub.s32 32, %v1290
  %v1292 = vshrl.u32 683565275, %v1291
  %v1293 = vshll.u32 683565275, %v1290
  %v1294 = vshrl.u32 2475754826, %v1291
  %v1295 = vor.u32 %v1293, %v1294
  %v1296 = vshll.u32 2475754826, %v1290
  %v1297 = vshrl.u32 2131351028, %v1291
  %v1298 = vor.u32 %v1296, %v1297
  %v1299 = vshll.u32 2131351028, %v1290
  %v1300 = vshrl.u32 2102212464, %v1291
  %v1301 = vor.u32 %v1299, %v1300
  %v1302 = vshll.u32 2102212464, %v1290
  %v1303 = vshrl.u32 920167782, %v1291
  %v1304 = vor.u32 %v1302, %v1303
  %v1305 = vshll.u32 920167782, %v1290
  %v1306 = vshrl.u32 1326507024, %v1291
  %v1307 = vor.u32 %v1305, %v1306
  %vm1308 = vcmp.lt.s32.totalorder %v1289, 1
  %vm1309 = vcmp.lt.s32.totalorder %v1289, 2
  %vm1310 = vcmp.lt.s32.totalorder %v1289, 3
  %vm1311 = vcmp.lt.s32.totalorder %v1289, 4
  %v1312 = vsel %vm1308, %v1292, %v1295
  %v1313 = vsel %vm1311, %v1301, 2102212464
  %v1314 = vsel %vm1310, %v1298, %v1313
  %v1315 = vsel %vm1309, %v1312, %v1314
  %v1316 = vsel %vm1308, %v1295, %v1298
  %v1317 = vsel %vm1311, %v1304, 920167782
  %v1318 = vsel %vm1310, %v1301, %v1317
  %v1319 = vsel %vm1309, %v1316, %v1318
  %v1320 = vsel %vm1308, %v1298, %v1301
  %v1321 = vsel %vm1311, %v1307, 1326507024
  %v1322 = vsel %vm1310, %v1304, %v1321
  %v1323 = vsel %vm1309, %v1320, %v1322
  %v1324 = vshll.u32 %v1284, 8
  %v1325 = vmul.u32.u64.compose %v1324, %v1323
  %v1326 = vextract.low.u32 %v1325
  %v1327 = vextract.high.u32 %v1325
  %v1328 = vmul.u32.u64.compose %v1324, %v1319
  %v1329 = vextract.low.u32 %v1328
  %v1330 = vextract.high.u32 %v1328
  %v1331 = vmul.u32 %v1324, %v1315
  %v1332 = vadd.s32 %v1327, %v1329
  %vm1333 = vc.u32 %v1327, %v1329
  %v1334 = vadd.s32 %v1330, 1
  %v1335 = vsel %vm1333, %v1334, %v1330
  %v1336 = vadd.s32 %v1331, %v1335
  %v1337 = vadd.s32 %v1336, 536870912
  %v1338 = vshrl.u32 %v1337, 30
  %v1339 = vshll.u32 %v1338, 30
  %v1340 = vsub.s32 %v1336, %v1339
  %vm1341 = vcmp.lt.s32.totalorder %v1340, 0
  %v1342 = vsub.s32 0, %v1340
  %v1343 = vsel %vm1341, %v1342, %v1340
  %v1344 = vclz %v1343
  %v1345 = vsub.s32 %v1344, 2
  %vm1346 = vcmp.gt.s32.totalorder 0, %v1345
  %v1347 = vsel %vm1346, 0, %v1345
  %v1348 = vsub.s32 32, %v1347
  %v1349 = vshll.u32 %v1340, %v1347
  %v1350 = vshrl.u32 %v1332, %v1348
  %v1351 = vor.u32 %v1349, %v1350
  %v1352 = vsub.s32 4294967266, %v1347
  %v1353 = vadd.s32 %v1352, 127
  %v1354 = vshll.u32 %v1353, 23
  %v1355 = vor.u32 4788187, %v1354
  %v1356 = vand.u32 2147483647, %v1355
  %v1358 = vcvt.s32.f32 %v1351
  %v1359 = vmul.f32 %v1358, %v1356
  %v1360 = vxor.u32 %v1359, 2147483648
  %v1361 = vsel %vm1278, %v1360, %v1359
  %v1362 = vsub.s32 4, %v1338
  %v1363 = vsel %vm1278, %v1362, %v1338
  %v1364 = vsel %vm1277, %v208, %v1361
  %v1365 = vsel %vm1277, 0, %v1363
  %v1366 = vcosq.f32.pop %v1364
  %v1367 = vsinq.f32.pop %v1364
  %vm1368 = vweird.f32 %v208
  %v1369 = vadd.s32 %v1365, 3
  %v1370 = vand.u32 %v1369, 3
  %vm1371 = vcmp.lt.s32.totalorder %v1370, 2
  %vm1372 = vcmp.eq.s32.totalorder %v1370, 0
  %v1373 = vxor.u32 %v1367, 2147483648
  %v1374 = vsel %vm1372, %v1366, %v1373
  %vm1375 = vcmp.eq.s32.totalorder %v1370, 2
  %v1376 = vxor.u32 %v1366, 2147483648
  %v1377 = vsel %vm1375, %v1376, %v1367
  %v1378 = vsel %vm1371, %v1374, %v1377
  %v1379 = vsel %vm1368, nan, %v1378
  %v1380 = vand.u32 2147483647, %v213
  %vm1381 = vcmp.le.f32.partialorder %v1380, 0.7853982
  %vm1382 = vcmp.lt.s32.totalorder %v213, 0
  %v1383 = vand.u32 %v213, 2139095040
  %v1384 = vshrl.u32 %v1383, 23
  %v1385 = vsub.s32 %v1384, 127
  %v1386 = vand.u32 2147483647, %v213
  %v1387 = vand.u32 %v1386, 8388607
  %v1388 = vor.u32 %v1387, 8388608
  %v1389 = vsub.s32 0, %v1388
  %v1390 = vadd.s32 %v1385, 1
  %vm1391 = vcmp.gt.s32.totalorder %v1390, 0
  %v1392 = vsel %vm1391, %v1390, 0
  %v1393 = vshrl.u32 %v1392, 5
  %v1394 = vand.u32 %v1392, 31
  %v1395 = vsub.s32 32, %v1394
  %v1396 = vshrl.u32 683565275, %v1395
  %v1397 = vshll.u32 683565275, %v1394
  %v1398 = vshrl.u32 2475754826, %v1395
  %v1399 = vor.u32 %v1397, %v1398
  %v1400 = vshll.u32 2475754826, %v1394
  %v1401 = vshrl.u32 2131351028, %v1395
  %v1402 = vor.u32 %v1400, %v1401
  %v1403 = vshll.u32 2131351028, %v1394
  %v1404 = vshrl.u32 2102212464, %v1395
  %v1405 = vor.u32 %v1403, %v1404
  %v1406 = vshll.u32 2102212464, %v1394
  %v1407 = vshrl.u32 920167782, %v1395
  %v1408 = vor.u32 %v1406, %v1407
  %v1409 = vshll.u32 920167782, %v1394
  %v1410 = vshrl.u32 1326507024, %v1395
  %v1411 = vor.u32 %v1409, %v1410
  %vm1412 = vcmp.lt.s32.totalorder %v1393, 1
  %vm1413 = vcmp.lt.s32.totalorder %v1393, 2
  %vm1414 = vcmp.lt.s32.totalorder %v1393, 3
  %vm1415 = vcmp.lt.s32.totalorder %v1393, 4
  %v1416 = vsel %vm1412, %v1396, %v1399
  %v1417 = vsel %vm1415, %v1405, 2102212464
  %v1418 = vsel %vm1414, %v1402, %v1417
  %v1419 = vsel %vm1413, %v1416, %v1418
  %v1420 = vsel %vm1412, %v1399, %v1402
  %v1421 = vsel %vm1415, %v1408, 920167782
  %v1422 = vsel %vm1414, %v1405, %v1421
  %v1423 = vsel %vm1413, %v1420, %v1422
  %v1424 = vsel %vm1412, %v1402, %v1405
  %v1425 = vsel %vm1415, %v1411, 1326507024
  %v1426 = vsel %vm1414, %v1408, %v1425
  %v1427 = vsel %vm1413, %v1424, %v1426
  %v1428 = vshll.u32 %v1388, 8
  %v1429 = vmul.u32.u64.compose %v1428, %v1427
  %v1430 = vextract.low.u32 %v1429
  %v1431 = vextract.high.u32 %v1429
  %v1432 = vmul.u32.u64.compose %v1428, %v1423
  %v1433 = vextract.low.u32 %v1432
  %v1434 = vextract.high.u32 %v1432
  %v1435 = vmul.u32 %v1428, %v1419
  %v1436 = vadd.s32 %v1431, %v1433
  %vm1437 = vc.u32 %v1431, %v1433
  %v1438 = vadd.s32 %v1434, 1
  %v1439 = vsel %vm1437, %v1438, %v1434
  %v1440 = vadd.s32 %v1435, %v1439
  %v1441 = vadd.s32 %v1440, 536870912
  %v1442 = vshrl.u32 %v1441, 30
  %v1443 = vshll.u32 %v1442, 30
  %v1444 = vsub.s32 %v1440, %v1443
  %vm1445 = vcmp.lt.s32.totalorder %v1444, 0
  %v1446 = vsub.s32 0, %v1444
  %v1447 = vsel %vm1445, %v1446, %v1444
  %v1448 = vclz %v1447
  %v1449 = vsub.s32 %v1448, 2
  %vm1450 = vcmp.gt.s32.totalorder 0, %v1449
  %v1451 = vsel %vm1450, 0, %v1449
  %v1452 = vsub.s32 32, %v1451
  %v1453 = vshll.u32 %v1444, %v1451
  %v1454 = vshrl.u32 %v1436, %v1452
  %v1455 = vor.u32 %v1453, %v1454
  %v1456 = vsub.s32 4294967266, %v1451
  %v1457 = vadd.s32 %v1456, 127
  %v1458 = vshll.u32 %v1457, 23
  %v1459 = vor.u32 4788187, %v1458
  %v1460 = vand.u32 2147483647, %v1459
  %v1462 = vcvt.s32.f32 %v1455
  %v1463 = vmul.f32 %v1462, %v1460
  %v1464 = vxor.u32 %v1463, 2147483648
  %v1465 = vsel %vm1382, %v1464, %v1463
  %v1466 = vsub.s32 4, %v1442
  %v1467 = vsel %vm1382, %v1466, %v1442
  %v1468 = vsel %vm1381, %v213, %v1465
  %v1469 = vsel %vm1381, 0, %v1467
  %v1470 = vcosq.f32.pop %v1468
  %v1471 = vsinq.f32.pop %v1468
  %vm1472 = vweird.f32 %v213
  %v1473 = vadd.s32 %v1469, 3
  %v1474 = vand.u32 %v1473, 3
  %vm1475 = vcmp.lt.s32.totalorder %v1474, 2
  %vm1476 = vcmp.eq.s32.totalorder %v1474, 0
  %v1477 = vxor.u32 %v1471, 2147483648
  %v1478 = vsel %vm1476, %v1470, %v1477
  %vm1479 = vcmp.eq.s32.totalorder %v1474, 2
  %v1480 = vxor.u32 %v1470, 2147483648
  %v1481 = vsel %vm1479, %v1480, %v1471
  %v1482 = vsel %vm1475, %v1478, %v1481
  %v1483 = vsel %vm1472, nan, %v1482
  %v1484 = vand.u32 2147483647, %v218
  %vm1485 = vcmp.le.f32.partialorder %v1484, 0.7853982
  %vm1486 = vcmp.lt.s32.totalorder %v218, 0
  %v1487 = vand.u32 %v218, 2139095040
  %v1488 = vshrl.u32 %v1487, 23
  %v1489 = vsub.s32 %v1488, 127
  %v1490 = vand.u32 2147483647, %v218
  %v1491 = vand.u32 %v1490, 8388607
  %v1492 = vor.u32 %v1491, 8388608
  %v1493 = vsub.s32 0, %v1492
  %v1494 = vadd.s32 %v1489, 1
  %vm1495 = vcmp.gt.s32.totalorder %v1494, 0
  %v1496 = vsel %vm1495, %v1494, 0
  %v1497 = vshrl.u32 %v1496, 5
  %v1498 = vand.u32 %v1496, 31
  %v1499 = vsub.s32 32, %v1498
  %v1500 = vshrl.u32 683565275, %v1499
  %v1501 = vshll.u32 683565275, %v1498
  %v1502 = vshrl.u32 2475754826, %v1499
  %v1503 = vor.u32 %v1501, %v1502
  %v1504 = vshll.u32 2475754826, %v1498
  %v1505 = vshrl.u32 2131351028, %v1499
  %v1506 = vor.u32 %v1504, %v1505
  %v1507 = vshll.u32 2131351028, %v1498
  %v1508 = vshrl.u32 2102212464, %v1499
  %v1509 = vor.u32 %v1507, %v1508
  %v1510 = vshll.u32 2102212464, %v1498
  %v1511 = vshrl.u32 920167782, %v1499
  %v1512 = vor.u32 %v1510, %v1511
  %v1513 = vshll.u32 920167782, %v1498
  %v1514 = vshrl.u32 1326507024, %v1499
  %v1515 = vor.u32 %v1513, %v1514
  %vm1516 = vcmp.lt.s32.totalorder %v1497, 1
  %vm1517 = vcmp.lt.s32.totalorder %v1497, 2
  %vm1518 = vcmp.lt.s32.totalorder %v1497, 3
  %vm1519 = vcmp.lt.s32.totalorder %v1497, 4
  %v1520 = vsel %vm1516, %v1500, %v1503
  %v1521 = vsel %vm1519, %v1509, 2102212464
  %v1522 = vsel %vm1518, %v1506, %v1521
  %v1523 = vsel %vm1517, %v1520, %v1522
  %v1524 = vsel %vm1516, %v1503, %v1506
  %v1525 = vsel %vm1519, %v1512, 920167782
  %v1526 = vsel %vm1518, %v1509, %v1525
  %v1527 = vsel %vm1517, %v1524, %v1526
  %v1528 = vsel %vm1516, %v1506, %v1509
  %v1529 = vsel %vm1519, %v1515, 1326507024
  %v1530 = vsel %vm1518, %v1512, %v1529
  %v1531 = vsel %vm1517, %v1528, %v1530
  %v1532 = vshll.u32 %v1492, 8
  %v1533 = vmul.u32.u64.compose %v1532, %v1531
  %v1534 = vextract.low.u32 %v1533
  %v1535 = vextract.high.u32 %v1533
  %v1536 = vmul.u32.u64.compose %v1532, %v1527
  %v1537 = vextract.low.u32 %v1536
  %v1538 = vextract.high.u32 %v1536
  %v1539 = vmul.u32 %v1532, %v1523
  %v1540 = vadd.s32 %v1535, %v1537
  %vm1541 = vc.u32 %v1535, %v1537
  %v1542 = vadd.s32 %v1538, 1
  %v1543 = vsel %vm1541, %v1542, %v1538
  %v1544 = vadd.s32 %v1539, %v1543
  %v1545 = vadd.s32 %v1544, 536870912
  %v1546 = vshrl.u32 %v1545, 30
  %v1547 = vshll.u32 %v1546, 30
  %v1548 = vsub.s32 %v1544, %v1547
  %vm1549 = vcmp.lt.s32.totalorder %v1548, 0
  %v1550 = vsub.s32 0, %v1548
  %v1551 = vsel %vm1549, %v1550, %v1548
  %v1552 = vclz %v1551
  %v1553 = vsub.s32 %v1552, 2
  %vm1554 = vcmp.gt.s32.totalorder 0, %v1553
  %v1555 = vsel %vm1554, 0, %v1553
  %v1556 = vsub.s32 32, %v1555
  %v1557 = vshll.u32 %v1548, %v1555
  %v1558 = vshrl.u32 %v1540, %v1556
  %v1559 = vor.u32 %v1557, %v1558
  %v1560 = vsub.s32 4294967266, %v1555
  %v1561 = vadd.s32 %v1560, 127
  %v1562 = vshll.u32 %v1561, 23
  %v1563 = vor.u32 4788187, %v1562
  %v1564 = vand.u32 2147483647, %v1563
  %v1566 = vcvt.s32.f32 %v1559
  %v1567 = vmul.f32 %v1566, %v1564
  %v1568 = vxor.u32 %v1567, 2147483648
  %v1569 = vsel %vm1486, %v1568, %v1567
  %v1570 = vsub.s32 4, %v1546
  %v1571 = vsel %vm1486, %v1570, %v1546
  %v1572 = vsel %vm1485, %v218, %v1569
  %v1573 = vsel %vm1485, 0, %v1571
  %v1574 = vcosq.f32.pop %v1572
  %v1575 = vsinq.f32.pop %v1572
  %vm1576 = vweird.f32 %v218
  %v1577 = vadd.s32 %v1573, 3
  %v1578 = vand.u32 %v1577, 3
  %vm1579 = vcmp.lt.s32.totalorder %v1578, 2
  %vm1580 = vcmp.eq.s32.totalorder %v1578, 0
  %v1581 = vxor.u32 %v1575, 2147483648
  %v1582 = vsel %vm1580, %v1574, %v1581
  %vm1583 = vcmp.eq.s32.totalorder %v1578, 2
  %v1584 = vxor.u32 %v1574, 2147483648
  %v1585 = vsel %vm1583, %v1584, %v1575
  %v1586 = vsel %vm1579, %v1582, %v1585
  %v1587 = vsel %vm1576, nan, %v1586
  %v1588 = vand.u32 2147483647, %v223
  %vm1589 = vcmp.le.f32.partialorder %v1588, 0.7853982
  %vm1590 = vcmp.lt.s32.totalorder %v223, 0
  %v1591 = vand.u32 %v223, 2139095040
  %v1592 = vshrl.u32 %v1591, 23
  %v1593 = vsub.s32 %v1592, 127
  %v1594 = vand.u32 2147483647, %v223
  %v1595 = vand.u32 %v1594, 8388607
  %v1596 = vor.u32 %v1595, 8388608
  %v1597 = vsub.s32 0, %v1596
  %v1598 = vadd.s32 %v1593, 1
  %vm1599 = vcmp.gt.s32.totalorder %v1598, 0
  %v1600 = vsel %vm1599, %v1598, 0
  %v1601 = vshrl.u32 %v1600, 5
  %v1602 = vand.u32 %v1600, 31
  %v1603 = vsub.s32 32, %v1602
  %v1604 = vshrl.u32 683565275, %v1603
  %v1605 = vshll.u32 683565275, %v1602
  %v1606 = vshrl.u32 2475754826, %v1603
  %v1607 = vor.u32 %v1605, %v1606
  %v1608 = vshll.u32 2475754826, %v1602
  %v1609 = vshrl.u32 2131351028, %v1603
  %v1610 = vor.u32 %v1608, %v1609
  %v1611 = vshll.u32 2131351028, %v1602
  %v1612 = vshrl.u32 2102212464, %v1603
  %v1613 = vor.u32 %v1611, %v1612
  %v1614 = vshll.u32 2102212464, %v1602
  %v1615 = vshrl.u32 920167782, %v1603
  %v1616 = vor.u32 %v1614, %v1615
  %v1617 = vshll.u32 920167782, %v1602
  %v1618 = vshrl.u32 1326507024, %v1603
  %v1619 = vor.u32 %v1617, %v1618
  %vm1620 = vcmp.lt.s32.totalorder %v1601, 1
  %vm1621 = vcmp.lt.s32.totalorder %v1601, 2
  %vm1622 = vcmp.lt.s32.totalorder %v1601, 3
  %vm1623 = vcmp.lt.s32.totalorder %v1601, 4
  %v1624 = vsel %vm1620, %v1604, %v1607
  %v1625 = vsel %vm1623, %v1613, 2102212464
  %v1626 = vsel %vm1622, %v1610, %v1625
  %v1627 = vsel %vm1621, %v1624, %v1626
  %v1628 = vsel %vm1620, %v1607, %v1610
  %v1629 = vsel %vm1623, %v1616, 920167782
  %v1630 = vsel %vm1622, %v1613, %v1629
  %v1631 = vsel %vm1621, %v1628, %v1630
  %v1632 = vsel %vm1620, %v1610, %v1613
  %v1633 = vsel %vm1623, %v1619, 1326507024
  %v1634 = vsel %vm1622, %v1616, %v1633
  %v1635 = vsel %vm1621, %v1632, %v1634
  %v1636 = vshll.u32 %v1596, 8
  %v1637 = vmul.u32.u64.compose %v1636, %v1635
  %v1638 = vextract.low.u32 %v1637
  %v1639 = vextract.high.u32 %v1637
  %v1640 = vmul.u32.u64.compose %v1636, %v1631
  %v1641 = vextract.low.u32 %v1640
  %v1642 = vextract.high.u32 %v1640
  %v1643 = vmul.u32 %v1636, %v1627
  %v1644 = vadd.s32 %v1639, %v1641
  %vm1645 = vc.u32 %v1639, %v1641
  %v1646 = vadd.s32 %v1642, 1
  %v1647 = vsel %vm1645, %v1646, %v1642
  %v1648 = vadd.s32 %v1643, %v1647
  %v1649 = vadd.s32 %v1648, 536870912
  %v1650 = vshrl.u32 %v1649, 30
  %v1651 = vshll.u32 %v1650, 30
  %v1652 = vsub.s32 %v1648, %v1651
  %vm1653 = vcmp.lt.s32.totalorder %v1652, 0
  %v1654 = vsub.s32 0, %v1652
  %v1655 = vsel %vm1653, %v1654, %v1652
  %v1656 = vclz %v1655
  %v1657 = vsub.s32 %v1656, 2
  %vm1658 = vcmp.gt.s32.totalorder 0, %v1657
  %v1659 = vsel %vm1658, 0, %v1657
  %v1660 = vsub.s32 32, %v1659
  %v1661 = vshll.u32 %v1652, %v1659
  %v1662 = vshrl.u32 %v1644, %v1660
  %v1663 = vor.u32 %v1661, %v1662
  %v1664 = vsub.s32 4294967266, %v1659
  %v1665 = vadd.s32 %v1664, 127
  %v1666 = vshll.u32 %v1665, 23
  %v1667 = vor.u32 4788187, %v1666
  %v1668 = vand.u32 2147483647, %v1667
  %v1670 = vcvt.s32.f32 %v1663
  %v1671 = vmul.f32 %v1670, %v1668
  %v1672 = vxor.u32 %v1671, 2147483648
  %v1673 = vsel %vm1590, %v1672, %v1671
  %v1674 = vsub.s32 4, %v1650
  %v1675 = vsel %vm1590, %v1674, %v1650
  %v1676 = vsel %vm1589, %v223, %v1673
  %v1677 = vsel %vm1589, 0, %v1675
  %v1678 = vcosq.f32.pop %v1676
  %v1679 = vsinq.f32.pop %v1676
  %vm1680 = vweird.f32 %v223
  %v1681 = vadd.s32 %v1677, 3
  %v1682 = vand.u32 %v1681, 3
  %vm1683 = vcmp.lt.s32.totalorder %v1682, 2
  %vm1684 = vcmp.eq.s32.totalorder %v1682, 0
  %v1685 = vxor.u32 %v1679, 2147483648
  %v1686 = vsel %vm1684, %v1678, %v1685
  %vm1687 = vcmp.eq.s32.totalorder %v1682, 2
  %v1688 = vxor.u32 %v1678, 2147483648
  %v1689 = vsel %vm1687, %v1688, %v1679
  %v1690 = vsel %vm1683, %v1686, %v1689
  %v1691 = vsel %vm1680, nan, %v1690
  %v1692 = vand.u32 2147483647, %v228
  %vm1693 = vcmp.le.f32.partialorder %v1692, 0.7853982
  %vm1694 = vcmp.lt.s32.totalorder %v228, 0
  %v1695 = vand.u32 %v228, 2139095040
  %v1696 = vshrl.u32 %v1695, 23
  %v1697 = vsub.s32 %v1696, 127
  %v1698 = vand.u32 2147483647, %v228
  %v1699 = vand.u32 %v1698, 8388607
  %v1700 = vor.u32 %v1699, 8388608
  %v1701 = vsub.s32 0, %v1700
  %v1702 = vadd.s32 %v1697, 1
  %vm1703 = vcmp.gt.s32.totalorder %v1702, 0
  %v1704 = vsel %vm1703, %v1702, 0
  %v1705 = vshrl.u32 %v1704, 5
  %v1706 = vand.u32 %v1704, 31
  %v1707 = vsub.s32 32, %v1706
  %v1708 = vshrl.u32 683565275, %v1707
  %v1709 = vshll.u32 683565275, %v1706
  %v1710 = vshrl.u32 2475754826, %v1707
  %v1711 = vor.u32 %v1709, %v1710
  %v1712 = vshll.u32 2475754826, %v1706
  %v1713 = vshrl.u32 2131351028, %v1707
  %v1714 = vor.u32 %v1712, %v1713
  %v1715 = vshll.u32 2131351028, %v1706
  %v1716 = vshrl.u32 2102212464, %v1707
  %v1717 = vor.u32 %v1715, %v1716
  %v1718 = vshll.u32 2102212464, %v1706
  %v1719 = vshrl.u32 920167782, %v1707
  %v1720 = vor.u32 %v1718, %v1719
  %v1721 = vshll.u32 920167782, %v1706
  %v1722 = vshrl.u32 1326507024, %v1707
  %v1723 = vor.u32 %v1721, %v1722
  %vm1724 = vcmp.lt.s32.totalorder %v1705, 1
  %vm1725 = vcmp.lt.s32.totalorder %v1705, 2
  %vm1726 = vcmp.lt.s32.totalorder %v1705, 3
  %vm1727 = vcmp.lt.s32.totalorder %v1705, 4
  %v1728 = vsel %vm1724, %v1708, %v1711
  %v1729 = vsel %vm1727, %v1717, 2102212464
  %v1730 = vsel %vm1726, %v1714, %v1729
  %v1731 = vsel %vm1725, %v1728, %v1730
  %v1732 = vsel %vm1724, %v1711, %v1714
  %v1733 = vsel %vm1727, %v1720, 920167782
  %v1734 = vsel %vm1726, %v1717, %v1733
  %v1735 = vsel %vm1725, %v1732, %v1734
  %v1736 = vsel %vm1724, %v1714, %v1717
  %v1737 = vsel %vm1727, %v1723, 1326507024
  %v1738 = vsel %vm1726, %v1720, %v1737
  %v1739 = vsel %vm1725, %v1736, %v1738
  %v1740 = vshll.u32 %v1700, 8
  %v1741 = vmul.u32.u64.compose %v1740, %v1739
  %v1742 = vextract.low.u32 %v1741
  %v1743 = vextract.high.u32 %v1741
  %v1744 = vmul.u32.u64.compose %v1740, %v1735
  %v1745 = vextract.low.u32 %v1744
  %v1746 = vextract.high.u32 %v1744
  %v1747 = vmul.u32 %v1740, %v1731
  %v1748 = vadd.s32 %v1743, %v1745
  %vm1749 = vc.u32 %v1743, %v1745
  %v1750 = vadd.s32 %v1746, 1
  %v1751 = vsel %vm1749, %v1750, %v1746
  %v1752 = vadd.s32 %v1747, %v1751
  %v1753 = vadd.s32 %v1752, 536870912
  %v1754 = vshrl.u32 %v1753, 30
  %v1755 = vshll.u32 %v1754, 30
  %v1756 = vsub.s32 %v1752, %v1755
  %vm1757 = vcmp.lt.s32.totalorder %v1756, 0
  %v1758 = vsub.s32 0, %v1756
  %v1759 = vsel %vm1757, %v1758, %v1756
  %v1760 = vclz %v1759
  %v1761 = vsub.s32 %v1760, 2
  %vm1762 = vcmp.gt.s32.totalorder 0, %v1761
  %v1763 = vsel %vm1762, 0, %v1761
  %v1764 = vsub.s32 32, %v1763
  %v1765 = vshll.u32 %v1756, %v1763
  %v1766 = vshrl.u32 %v1748, %v1764
  %v1767 = vor.u32 %v1765, %v1766
  %v1768 = vsub.s32 4294967266, %v1763
  %v1769 = vadd.s32 %v1768, 127
  %v1770 = vshll.u32 %v1769, 23
  %v1771 = vor.u32 4788187, %v1770
  %v1772 = vand.u32 2147483647, %v1771
  %v1774 = vcvt.s32.f32 %v1767
  %v1775 = vmul.f32 %v1774, %v1772
  %v1776 = vxor.u32 %v1775, 2147483648
  %v1777 = vsel %vm1694, %v1776, %v1775
  %v1778 = vsub.s32 4, %v1754
  %v1779 = vsel %vm1694, %v1778, %v1754
  %v1780 = vsel %vm1693, %v228, %v1777
  %v1781 = vsel %vm1693, 0, %v1779
  %v1782 = vcosq.f32.pop %v1780
  %v1783 = vsinq.f32.pop %v1780
  %vm1784 = vweird.f32 %v228
  %v1785 = vadd.s32 %v1781, 3
  %v1786 = vand.u32 %v1785, 3
  %vm1787 = vcmp.lt.s32.totalorder %v1786, 2
  %vm1788 = vcmp.eq.s32.totalorder %v1786, 0
  %v1789 = vxor.u32 %v1783, 2147483648
  %v1790 = vsel %vm1788, %v1782, %v1789
  %vm1791 = vcmp.eq.s32.totalorder %v1786, 2
  %v1792 = vxor.u32 %v1782, 2147483648
  %v1793 = vsel %vm1791, %v1792, %v1783
  %v1794 = vsel %vm1787, %v1790, %v1793
  %v1795 = vsel %vm1784, nan, %v1794
  %v1796 = vand.u32 2147483647, %v233
  %vm1797 = vcmp.le.f32.partialorder %v1796, 0.7853982
  %vm1798 = vcmp.lt.s32.totalorder %v233, 0
  %v1799 = vand.u32 %v233, 2139095040
  %v1800 = vshrl.u32 %v1799, 23
  %v1801 = vsub.s32 %v1800, 127
  %v1802 = vand.u32 2147483647, %v233
  %v1803 = vand.u32 %v1802, 8388607
  %v1804 = vor.u32 %v1803, 8388608
  %v1805 = vsub.s32 0, %v1804
  %v1806 = vadd.s32 %v1801, 1
  %vm1807 = vcmp.gt.s32.totalorder %v1806, 0
  %v1808 = vsel %vm1807, %v1806, 0
  %v1809 = vshrl.u32 %v1808, 5
  %v1810 = vand.u32 %v1808, 31
  %v1811 = vsub.s32 32, %v1810
  %v1812 = vshrl.u32 683565275, %v1811
  %v1813 = vshll.u32 683565275, %v1810
  %v1814 = vshrl.u32 2475754826, %v1811
  %v1815 = vor.u32 %v1813, %v1814
  %v1816 = vshll.u32 2475754826, %v1810
  %v1817 = vshrl.u32 2131351028, %v1811
  %v1818 = vor.u32 %v1816, %v1817
  %v1819 = vshll.u32 2131351028, %v1810
  %v1820 = vshrl.u32 2102212464, %v1811
  %v1821 = vor.u32 %v1819, %v1820
  %v1822 = vshll.u32 2102212464, %v1810
  %v1823 = vshrl.u32 920167782, %v1811
  %v1824 = vor.u32 %v1822, %v1823
  %v1825 = vshll.u32 920167782, %v1810
  %v1826 = vshrl.u32 1326507024, %v1811
  %v1827 = vor.u32 %v1825, %v1826
  %vm1828 = vcmp.lt.s32.totalorder %v1809, 1
  %vm1829 = vcmp.lt.s32.totalorder %v1809, 2
  %vm1830 = vcmp.lt.s32.totalorder %v1809, 3
  %vm1831 = vcmp.lt.s32.totalorder %v1809, 4
  %v1832 = vsel %vm1828, %v1812, %v1815
  %v1833 = vsel %vm1831, %v1821, 2102212464
  %v1834 = vsel %vm1830, %v1818, %v1833
  %v1835 = vsel %vm1829, %v1832, %v1834
  %v1836 = vsel %vm1828, %v1815, %v1818
  %v1837 = vsel %vm1831, %v1824, 920167782
  %v1838 = vsel %vm1830, %v1821, %v1837
  %v1839 = vsel %vm1829, %v1836, %v1838
  %v1840 = vsel %vm1828, %v1818, %v1821
  %v1841 = vsel %vm1831, %v1827, 1326507024
  %v1842 = vsel %vm1830, %v1824, %v1841
  %v1843 = vsel %vm1829, %v1840, %v1842
  %v1844 = vshll.u32 %v1804, 8
  %v1845 = vmul.u32.u64.compose %v1844, %v1843
  %v1846 = vextract.low.u32 %v1845
  %v1847 = vextract.high.u32 %v1845
  %v1848 = vmul.u32.u64.compose %v1844, %v1839
  %v1849 = vextract.low.u32 %v1848
  %v1850 = vextract.high.u32 %v1848
  %v1851 = vmul.u32 %v1844, %v1835
  %v1852 = vadd.s32 %v1847, %v1849
  %vm1853 = vc.u32 %v1847, %v1849
  %v1854 = vadd.s32 %v1850, 1
  %v1855 = vsel %vm1853, %v1854, %v1850
  %v1856 = vadd.s32 %v1851, %v1855
  %v1857 = vadd.s32 %v1856, 536870912
  %v1858 = vshrl.u32 %v1857, 30
  %v1859 = vshll.u32 %v1858, 30
  %v1860 = vsub.s32 %v1856, %v1859
  %vm1861 = vcmp.lt.s32.totalorder %v1860, 0
  %v1862 = vsub.s32 0, %v1860
  %v1863 = vsel %vm1861, %v1862, %v1860
  %v1864 = vclz %v1863
  %v1865 = vsub.s32 %v1864, 2
  %vm1866 = vcmp.gt.s32.totalorder 0, %v1865
  %v1867 = vsel %vm1866, 0, %v1865
  %v1868 = vsub.s32 32, %v1867
  %v1869 = vshll.u32 %v1860, %v1867
  %v1870 = vshrl.u32 %v1852, %v1868
  %v1871 = vor.u32 %v1869, %v1870
  %v1872 = vsub.s32 4294967266, %v1867
  %v1873 = vadd.s32 %v1872, 127
  %v1874 = vshll.u32 %v1873, 23
  %v1875 = vor.u32 4788187, %v1874
  %v1876 = vand.u32 2147483647, %v1875
  %v1878 = vcvt.s32.f32 %v1871
  %v1879 = vmul.f32 %v1878, %v1876
  %v1880 = vxor.u32 %v1879, 2147483648
  %v1881 = vsel %vm1798, %v1880, %v1879
  %v1882 = vsub.s32 4, %v1858
  %v1883 = vsel %vm1798, %v1882, %v1858
  %v1884 = vsel %vm1797, %v233, %v1881
  %v1885 = vsel %vm1797, 0, %v1883
  %v1886 = vcosq.f32.pop %v1884
  %v1887 = vsinq.f32.pop %v1884
  %vm1888 = vweird.f32 %v233
  %v1889 = vadd.s32 %v1885, 3
  %v1890 = vand.u32 %v1889, 3
  %vm1891 = vcmp.lt.s32.totalorder %v1890, 2
  %vm1892 = vcmp.eq.s32.totalorder %v1890, 0
  %v1893 = vxor.u32 %v1887, 2147483648
  %v1894 = vsel %vm1892, %v1886, %v1893
  %vm1895 = vcmp.eq.s32.totalorder %v1890, 2
  %v1896 = vxor.u32 %v1886, 2147483648
  %v1897 = vsel %vm1895, %v1896, %v1887
  %v1898 = vsel %vm1891, %v1894, %v1897
  %v1899 = vsel %vm1888, nan, %v1898
  %1900 = vst [vmem:[%s3] sm:$0xff] %v339
  %1901 = vst [vmem:[%s3 + $0x8] sm:$0xff] %v443
  %1902 = vst [vmem:[%s3 + $0x10] sm:$0xff] %v547
  %1903 = vst [vmem:[%s3 + $0x18] sm:$0xff] %v651
  %1904 = vst [vmem:[%s3 + $0x20] sm:$0xff] %v755
  %1905 = vst [vmem:[%s3 + $0x28] sm:$0xff] %v859
  %1906 = vst [vmem:[%s3 + $0x30] sm:$0xff] %v963
  %1907 = vst [vmem:[%s3 + $0x38] sm:$0xff] %v1067
  %1908 = vst [vmem:[%s3 + $0x40] sm:$0xff] %v1171
  %1909 = vst [vmem:[%s3 + $0x48] sm:$0xff] %v1275
  %1910 = vst [vmem:[%s3 + $0x50] sm:$0xff] %v1379
  %1911 = vst [vmem:[%s3 + $0x58] sm:$0xff] %v1483
  %1912 = vst [vmem:[%s3 + $0x60] sm:$0xff] %v1587
  %1913 = vst [vmem:[%s3 + $0x68] sm:$0xff] %v1691
  %1914 = vst [vmem:[%s3 + $0x70] sm:$0xff] %v1795
  %1915 = vst [vmem:[%s3 + $0x78] sm:$0xff] %v1899
  // Predicated region
  $region14: #{fourier_feature_layer.1} parent=0 // pred_check
    _
  $region15: #{fourier_feature_layer.1} parent=0 // pred_check_branch
    %1917 = sbr.rel (0) target = $region17
  $region16: #{fourier_feature_layer.1} parent=0 // pred_region
    _
  $region17: #{fourier_feature_layer.1} parent=0 // pred_fallthru
    _
  // Predicated region
  $region18: #{fourier_feature_layer.1} parent=0 // pred_check
    _
  $region19: #{fourier_feature_layer.1} parent=0 // pred_check_branch
    %1919 = sbr.rel (0) target = $region21
  $region20: #{fourier_feature_layer.1} parent=0 // pred_region
    _
  $region21: #{fourier_feature_layer.1} parent=0 // pred_fallthru
    _

</llo_original>
